<compile_context>
chip_gen: v5e
topology: v5e:2x2
jax: 0.10.0
libtpu: 0.0.40
codegen_flags: <defaults>
</compile_context>

<pallas_src>
import jax
import jax.numpy as jnp
from jax import lax
from jax.experimental import pallas as pl
from jax.experimental.pallas import tpu as pltpu

C_IN, C_OUT, KH, KW = 3, 3, 33, 33
STRIDE, PAD, DIL = 33, 22, 22
LANES = 128


def _round_up(x, m):
    return (x + m - 1) // m * m


def _gemm_bias_tanh_kernel(p_ref, w_ref, b_ref, o_ref):
    # p_ref: (Mp, Kp) bf16 patches; w_ref: (Kp, 128) bf16; b_ref: (1, 128) f32.
    # Single-pass bf16 MXU matmul with f32 accumulation; f32 epilogue.
    acc = jnp.dot(p_ref[...], w_ref[...], preferred_element_type=jnp.float32)
    o_ref[...] = jnp.tanh(acc + b_ref[...])


def prepare_conv_params(w, b):
    """One-time weight/bias prep (hoisted out of the per-call path)."""
    K = C_IN * KH * KW
    Kp = _round_up(K, LANES)
    wm = w.reshape(C_OUT, K).T.astype(jnp.bfloat16)                 # (K, C_out)
    w_pad = jnp.zeros((Kp, LANES), jnp.bfloat16).at[:K, :C_OUT].set(wm)
    b_pad = jnp.zeros((1, LANES), jnp.float32).at[0, :C_OUT].set(b.astype(jnp.float32))
    return w_pad, b_pad


def _taps_along_axis(x, axis, n_out, k, size):
    """For each of n_out output positions along `axis`, extract its k dilated
    taps with static strided slices (no full pad, no gather). Taps that fall in
    the conv's implicit zero padding become zero slabs."""
    pieces = []
    for o in range(n_out):
        pos = [o * STRIDE - PAD + DIL * t for t in range(k)]
        lead = sum(1 for p in pos if p < 0)
        trail = sum(1 for p in pos if p >= size)
        nvalid = k - lead - trail
        if lead:
            zshape = list(x.shape)
            zshape[axis] = lead
            pieces.append(jnp.zeros(zshape, x.dtype))
        if nvalid > 0:
            start = pos[lead]
            limit = pos[lead + nvalid - 1] + 1
            pieces.append(lax.slice_in_dim(x, start, limit, stride=DIL, axis=axis))
        if trail:
            zshape = list(x.shape)
            zshape[axis] = trail
            pieces.append(jnp.zeros(zshape, x.dtype))
    return jnp.concatenate(pieces, axis=axis)        # axis size = n_out * k


@jax.jit
def conv_tanh(x, w_pad, b_pad):
    """x: (N, C_in, H, W) f32 NCHW; w_pad/b_pad from prepare_conv_params."""
    n, c, h, wd = x.shape
    oh = (h + 2 * PAD - DIL * (KH - 1) - 1) // STRIDE + 1
    ow = (wd + 2 * PAD - DIL * (KW - 1) - 1) // STRIDE + 1

    # ---- light-weight patch extraction (static strided slices only) ----
    g = _taps_along_axis(x, 2, oh, KH, h)            # (N, C, OH*KH, W)
    g = _taps_along_axis(g, 3, ow, KW, wd)           # (N, C, OH*KH, OW*KW)
    g = g.reshape(n, c, oh, KH, ow, KW)
    g = jnp.transpose(g, (0, 2, 4, 1, 3, 5))         # (N, OH, OW, C, KH, KW)

    M = n * oh * ow
    K = c * KH * KW
    Kp = w_pad.shape[0]
    Mp = _round_up(M, 16)

    p = g.reshape(M, K).astype(jnp.bfloat16)
    p_pad = jnp.zeros((Mp, Kp), jnp.bfloat16).at[:M, :K].set(p)

    # ---- hot path: GEMM + bias + tanh in Pallas ----
    out = pl.pallas_call(
        _gemm_bias_tanh_kernel,
        out_shape=jax.ShapeDtypeStruct((Mp, LANES), jnp.float32),
        grid=(1,),
        in_specs=[
            pl.BlockSpec((Mp, Kp), lambda i: (0, 0)),
            pl.BlockSpec((Kp, LANES), lambda i: (0, 0)),
            pl.BlockSpec((1, LANES), lambda i: (0, 0)),
        ],
        out_specs=pl.BlockSpec((Mp, LANES), lambda i: (0, 0)),
        compiler_params=pltpu.CompilerParams(dimension_semantics=("arbitrary",)),
    )(p_pad, w_pad, b_pad)

    out = out[:M, :C_OUT].reshape(n, oh, ow, C_OUT)
    return jnp.transpose(out, (0, 3, 1, 2))          # NCHW


if __name__ == "__main__":
    key = jax.random.PRNGKey(0)
    k1, k2, k3 = jax.random.split(key, 3)

    # Minimum valid spatial size is 661 (effective kernel 705 vs. pad 22);
    # 694x694 gives a 2x2 output map.
    H = W = 694
    x = jax.random.normal(k1, (1, C_IN, H, W), jnp.float32)

    # Deterministic conv parameters (PyTorch-like uniform(-1/sqrt(fan_in), ...)).
    fan_in = C_IN * KH * KW
    bound = 1.0 / (fan_in ** 0.5)
    wgt = jax.random.uniform(k2, (C_OUT, C_IN, KH, KW), jnp.float32, -bound, bound)
    bias = jax.random.uniform(k3, (C_OUT,), jnp.float32, -bound, bound)

    # One-time weight prep (hoisted, call-invariant).
    w_pad, b_pad = prepare_conv_params(wgt, bias)

    y = jax.block_until_ready(conv_tanh(x, w_pad, b_pad))

    # Sanity reference via XLA's conv (full f32 precision).
    ref = lax.conv_general_dilated(
        x, wgt,
        window_strides=(STRIDE, STRIDE),
        padding=((PAD, PAD), (PAD, PAD)),
        rhs_dilation=(DIL, DIL),
        dimension_numbers=("NCHW", "OIHW", "NCHW"),
        precision=lax.Precision.HIGHEST,
    )
    ref = jnp.tanh(ref + bias[None, :, None, None])

    assert y.shape == ref.shape == (1, C_OUT, 2, 2), y.shape
    # bf16 operands with f32 accumulation: tolerance widened vs. pure-f32 path.
    assert jnp.allclose(y, ref, rtol=1e-2, atol=1e-2), float(jnp.max(jnp.abs(y - ref)))
    print("KERNEL_OK")
</pallas_src>

<mosaic_0001>
module attributes {stable_mosaic.version = 11 : i64} {
  func.func @_gemm_bias_tanh_kernel(%arg0: i32, %arg1: memref<16x3328xbf16, #tpu.memory_space<vmem>>, %arg2: memref<3328x128xbf16, #tpu.memory_space<vmem>>, %arg3: memref<1x128xf32, #tpu.memory_space<vmem>>, %arg4: memref<16x128xf32, #tpu.memory_space<vmem>>) attributes {dimension_semantics = [#tpu.dimension_semantics<arbitrary>], iteration_bounds = array<i64: 1>, scalar_prefetch = 0 : i64, scratch_operands = 0 : i64, tpu.core_type = #tpu.core_type<tc>, window_params = [{pipeline_mode = #tpu.pipeline_mode<synchronous>, transform_indices = @transform_0, window_bounds = array<i64: 16, 3328>}, {pipeline_mode = #tpu.pipeline_mode<synchronous>, transform_indices = @transform_1, window_bounds = array<i64: 3328, 128>}, {pipeline_mode = #tpu.pipeline_mode<synchronous>, transform_indices = @transform_2, window_bounds = array<i64: 1, 128>}, {pipeline_mode = #tpu.pipeline_mode<synchronous>, transform_indices = @transform_3, window_bounds = array<i64: 16, 128>}]} {
    %c0 = arith.constant 0 : index
    %c0_0 = arith.constant 0 : index
    %0 = vector.load %arg1[%c0, %c0_0] : memref<16x3328xbf16, #tpu.memory_space<vmem>>, vector<16x3328xbf16>
    %c0_1 = arith.constant 0 : index
    %c0_2 = arith.constant 0 : index
    %1 = vector.load %arg2[%c0_1, %c0_2] : memref<3328x128xbf16, #tpu.memory_space<vmem>>, vector<3328x128xbf16>
    %cst = arith.constant dense<0.000000e+00> : vector<16x128xf32>
    %2 = tpu.matmul %0, %1, %cst {dimension_numbers = #tpu.dot_dimension_numbers<[1], [0], [0], [1], [0, 0, 1, 1], [], []>} : vector<16x3328xbf16>, vector<3328x128xbf16>, vector<16x128xf32> -> vector<16x128xf32>
    %c0_3 = arith.constant 0 : index
    %c0_4 = arith.constant 0 : index
    %3 = vector.load %arg3[%c0_3, %c0_4] : memref<1x128xf32, #tpu.memory_space<vmem>>, vector<1x128xf32>
    %4 = vector.broadcast %3 : vector<1x128xf32> to vector<16x128xf32>
    %5 = arith.addf %2, %4 : vector<16x128xf32>
    %6 = math.tanh %5 : vector<16x128xf32>
    %c0_5 = arith.constant 0 : index
    %c0_6 = arith.constant 0 : index
    %7 = vector.load %arg4[%c0_5, %c0_6] : memref<16x128xf32, #tpu.memory_space<vmem>>, vector<16x128xf32>
    tpu.vector_store %arg4[%c0_5, %c0_6], %6 {strides = array<i32>} : memref<16x128xf32, #tpu.memory_space<vmem>>, vector<16x128xf32>,
    return
  }
  func.func @transform_0(%arg0: i32) -> (i32, i32) {
    %c0_i32 = arith.constant 0 : i32
    %c0_i32_0 = arith.constant 0 : i32
    %c0_i32_1 = arith.constant 0 : i32
    return %c0_i32, %c0_i32_0 : i32, i32
  }
  func.func @transform_1(%arg0: i32) -> (i32, i32) {
    %c0_i32 = arith.constant 0 : i32
    %c0_i32_0 = arith.constant 0 : i32
    %c0_i32_1 = arith.constant 0 : i32
    return %c0_i32, %c0_i32_0 : i32, i32
  }
  func.func @transform_2(%arg0: i32) -> (i32, i32) {
    %c0_i32 = arith.constant 0 : i32
    %c0_i32_0 = arith.constant 0 : i32
    %c0_i32_1 = arith.constant 0 : i32
    return %c0_i32, %c0_i32_0 : i32, i32
  }
  func.func @transform_3(%arg0: i32) -> (i32, i32) {
    %c0_i32 = arith.constant 0 : i32
    %c0_i32_0 = arith.constant 0 : i32
    %c0_i32_1 = arith.constant 0 : i32
    return %c0_i32, %c0_i32_0 : i32, i32
  }
}

</mosaic_0001>

<llo_original>
// kernel: conv_tanh.1
$region0: #{conv_tanh.1}
  #allocation0 [shape = 'u32[]', space=smem, size = 0x4, offset = 0x4, fixed_abs, tag = 'smem constant byte address 0x4 - core index']
  #allocation1 [shape = 'u32[72,128]{1,0:T(1,128)}', space=vmem, size = 0x9000, scoped, tag = 'internal scratch']
  %s0 = inlined_call_operand.vmem [shape: bf16[16,3328], index: 0, kind: input, shape index: {}]
  %s1 = inlined_call_operand.hbm [shape: bf16[3328,128], index: 1, kind: input, shape index: {}]
  %s2 = inlined_call_operand.hbm [shape: f32[1,128], index: 2, kind: input, shape index: {}]
  %s3 = inlined_call_operand.vmem [shape: f32[16,128], index: 3, kind: output, shape index: {}]
  %s4 = sld [smem:[#allocation0]]
  $region30: #{conv_tanh.1} parent=0
    _
  %s6 = ssub.s32 1, %s4
  %s7 = scalar_select 0, %s6, %s4
  $region1: #{conv_tanh.1} parent=0
    #allocation2 [shape = 'u8[851968]{0}', space=vmem, size = 0xd0000, scoped, tag = 'input window, operand 1, single buffered']
    #allocation3 [shape = 's32[1]{0}', space=sflag, size = 0x4, scoped, tag = 'scoped memory for conv_tanh.1']
    #allocation4 [shape = 'u8[512]{0}', space=vmem, size = 0x400, scoped, tag = 'input window, operand 2, single buffered']
    #allocation5 [shape = 's32[1]{0}', space=sflag, size = 0x4, scoped, tag = 'scoped memory for conv_tanh.1']
    %8 = vsyncpa [#allocation3], 0
    %9 = vsyncpa [#allocation5], 0
    // Predicated region
    $region2: #{conv_tanh.1} parent=1 // pred_check
      _
    $region3: #{conv_tanh.1} parent=1 // pred_check_branch
      %11 = sbr.rel (0) target = $region5
    $region4: #{conv_tanh.1} parent=1 // pred_region
      _
    $region5: #{conv_tanh.1} parent=1 // pred_fallthru
      _
    // Predicated region
    $region6: #{conv_tanh.1} parent=1 // pred_check
      _
    $region7: #{conv_tanh.1} parent=1 // pred_check_branch
      %13 = sbr.rel (0) target = $region9
    $region8: #{conv_tanh.1} parent=1 // pred_region
      %15 = vsyncadd [#allocation3], 0
      %s16 = sshll.u32 %s1, 4
      %s17 = int_to_ptr.hbm [resolvable:$true] %s16
      %s18 = sshll.u32 [#allocation2], 4
      %s19 = int_to_ptr.vmem [resolvable:$true] %s18
      %24 = dma.hbm_to_vmem [thread:$0]  %s17, 26624, %s19, [#allocation3], 64, 64, 4
    $region9: #{conv_tanh.1} parent=1 // pred_fallthru
      _
    // Predicated region
    $region10: #{conv_tanh.1} parent=1 // pred_check
      _
    $region11: #{conv_tanh.1} parent=1 // pred_check_branch
      %26 = sbr.rel (0) target = $region13
    $region12: #{conv_tanh.1} parent=1 // pred_region
      %28 = vsyncadd [#allocation5], 0
      %s30 = sshll.u32 %s2, 4
      %s31 = int_to_ptr.hbm [resolvable:$true] %s30
      %s32 = sshll.u32 [#allocation4], 4
      %s33 = int_to_ptr.vmem [resolvable:$true] %s32
      %35 = dma.hbm_to_vmem [thread:$0]  %s31, 16, %s33, [#allocation5]
    $region13: #{conv_tanh.1} parent=1 // pred_fallthru
      _
    // Predicated region
    $region14: #{conv_tanh.1} parent=1 // pred_check
      _
    $region15: #{conv_tanh.1} parent=1 // pred_check_branch
      %37 = sbr.rel (0) target = $region17
    $region16: #{conv_tanh.1} parent=1 // pred_region
      %39 = dma.done [#allocation3], 26624
    $region17: #{conv_tanh.1} parent=1 // pred_fallthru
      _
    // Predicated region
    $region18: #{conv_tanh.1} parent=1 // pred_check
      _
    $region19: #{conv_tanh.1} parent=1 // pred_check_branch
      %41 = sbr.rel (0) target = $region21
    $region20: #{conv_tanh.1} parent=1 // pred_region
      %43 = dma.done [#allocation5], 16
    $region21: #{conv_tanh.1} parent=1 // pred_fallthru
      _
    %v44 = vld [vmem:[%s0] sm:$0xff]
    %v45 = vld [vmem:[%s0 + $0x8] sm:$0xff]
    %v46 = vld [vmem:[%s0 + $0x10] sm:$0xff]
    %v47 = vld [vmem:[%s0 + $0x18] sm:$0xff]
    %v48 = vld [vmem:[%s0 + $0x20] sm:$0xff]
    %v49 = vld [vmem:[%s0 + $0x28] sm:$0xff]
    %v50 = vld [vmem:[%s0 + $0x30] sm:$0xff]
    %v51 = vld [vmem:[%s0 + $0x38] sm:$0xff]
    %v52 = vld [vmem:[%s0 + $0x40] sm:$0xff]
    %v53 = vld [vmem:[%s0 + $0x48] sm:$0xff]
    %v54 = vld [vmem:[%s0 + $0x50] sm:$0xff]
    %v55 = vld [vmem:[%s0 + $0x58] sm:$0xff]
    %v56 = vld [vmem:[%s0 + $0x60] sm:$0xff]
    %v57 = vld [vmem:[%s0 + $0x68] sm:$0xff]
    %v58 = vld [vmem:[%s0 + $0x70] sm:$0xff]
    %v59 = vld [vmem:[%s0 + $0x78] sm:$0xff]
    %v60 = vld [vmem:[%s0 + $0x80] sm:$0xff]
    %v61 = vld [vmem:[%s0 + $0x88] sm:$0xff]
    %v62 = vld [vmem:[%s0 + $0x90] sm:$0xff]
    %v63 = vld [vmem:[%s0 + $0x98] sm:$0xff]
    %v64 = vld [vmem:[%s0 + $0xa0] sm:$0xff]
    %v65 = vld [vmem:[%s0 + $0xa8] sm:$0xff]
    %v66 = vld [vmem:[%s0 + $0xb0] sm:$0xff]
    %v67 = vld [vmem:[%s0 + $0xb8] sm:$0xff]
    %v68 = vld [vmem:[%s0 + $0xc0] sm:$0xff]
    %v69 = vld [vmem:[%s0 + $0xc8] sm:$0xff]
    %v70 = vld [vmem:[#allocation2] sm:$0xf]
    %v71 = vld [vmem:[#allocation2 + $0x4] sm:$0xf]
    %v72 = vld [vmem:[#allocation2 + $0x8] sm:$0xf]
    %v73 = vld [vmem:[#allocation2 + $0xc] sm:$0xf]
    %v74 = vld [vmem:[#allocation2 + $0x10] sm:$0xf]
    %v75 = vld [vmem:[#allocation2 + $0x14] sm:$0xf]
    %v76 = vld [vmem:[#allocation2 + $0x18] sm:$0xf]
    %v77 = vld [vmem:[#allocation2 + $0x1c] sm:$0xf]
    %v78 = vld [vmem:[#allocation2 + $0x20] sm:$0xf]
    %v79 = vld [vmem:[#allocation2 + $0x24] sm:$0xf]
    %v80 = vld [vmem:[#allocation2 + $0x28] sm:$0xf]
    %v81 = vld [vmem:[#allocation2 + $0x2c] sm:$0xf]
    %v82 = vld [vmem:[#allocation2 + $0x30] sm:$0xf]
    %v83 = vld [vmem:[#allocation2 + $0x34] sm:$0xf]
    %v84 = vld [vmem:[#allocation2 + $0x38] sm:$0xf]
    %v85 = vld [vmem:[#allocation2 + $0x3c] sm:$0xf]
    %v86 = vld [vmem:[#allocation2 + $0x40] sm:$0xf]
    %v87 = vld [vmem:[#allocation2 + $0x44] sm:$0xf]
    %v88 = vld [vmem:[#allocation2 + $0x48] sm:$0xf]
    %v89 = vld [vmem:[#allocation2 + $0x4c] sm:$0xf]
    %v90 = vld [vmem:[#allocation2 + $0x50] sm:$0xf]
    %v91 = vld [vmem:[#allocation2 + $0x54] sm:$0xf]
    %v92 = vld [vmem:[#allocation2 + $0x58] sm:$0xf]
    %v93 = vld [vmem:[#allocation2 + $0x5c] sm:$0xf]
    %v94 = vld [vmem:[#allocation2 + $0x60] sm:$0xf]
    %v95 = vld [vmem:[#allocation2 + $0x64] sm:$0xf]
    %v96 = vld [vmem:[#allocation2 + $0x68] sm:$0xf]
    %v97 = vld [vmem:[#allocation2 + $0x6c] sm:$0xf]
    %v98 = vld [vmem:[#allocation2 + $0x70] sm:$0xf]
    %v99 = vld [vmem:[#allocation2 + $0x74] sm:$0xf]
    %v100 = vld [vmem:[#allocation2 + $0x78] sm:$0xf]
    %v101 = vld [vmem:[#allocation2 + $0x7c] sm:$0xf]
    %v102 = vld [vmem:[#allocation2 + $0x80] sm:$0xf]
    %v103 = vld [vmem:[#allocation2 + $0x84] sm:$0xf]
    %v104 = vld [vmem:[#allocation2 + $0x88] sm:$0xf]
    %v105 = vld [vmem:[#allocation2 + $0x8c] sm:$0xf]
    %v106 = vld [vmem:[#allocation2 + $0x90] sm:$0xf]
    %v107 = vld [vmem:[#allocation2 + $0x94] sm:$0xf]
    %v108 = vld [vmem:[#allocation2 + $0x98] sm:$0xf]
    %v109 = vld [vmem:[#allocation2 + $0x9c] sm:$0xf]
    %v110 = vld [vmem:[#allocation2 + $0xa0] sm:$0xf]
    %v111 = vld [vmem:[#allocation2 + $0xa4] sm:$0xf]
    %v112 = vld [vmem:[#allocation2 + $0xa8] sm:$0xf]
    %v113 = vld [vmem:[#allocation2 + $0xac] sm:$0xf]
    %v114 = vld [vmem:[#allocation2 + $0xb0] sm:$0xf]
    %v115 = vld [vmem:[#allocation2 + $0xb4] sm:$0xf]
    %v116 = vld [vmem:[#allocation2 + $0xb8] sm:$0xf]
    %v117 = vld [vmem:[#allocation2 + $0xbc] sm:$0xf]
    %v118 = vld [vmem:[#allocation2 + $0xc0] sm:$0xf]
    %v119 = vld [vmem:[#allocation2 + $0xc4] sm:$0xf]
    %v120 = vld [vmem:[#allocation2 + $0xc8] sm:$0xf]
    %v121 = vld [vmem:[#allocation2 + $0xcc] sm:$0xf]
    %v122 = vld [vmem:[#allocation2 + $0xd0] sm:$0xf]
    %v123 = vld [vmem:[#allocation2 + $0xd4] sm:$0xf]
    %v124 = vld [vmem:[#allocation2 + $0xd8] sm:$0xf]
    %v125 = vld [vmem:[#allocation2 + $0xdc] sm:$0xf]
    %v126 = vld [vmem:[#allocation2 + $0xe0] sm:$0xf]
    %v127 = vld [vmem:[#allocation2 + $0xe4] sm:$0xf]
    %v128 = vld [vmem:[#allocation2 + $0xe8] sm:$0xf]
    %v129 = vld [vmem:[#allocation2 + $0xec] sm:$0xf]
    %v130 = vld [vmem:[#allocation2 + $0xf0] sm:$0xf]
    %v131 = vld [vmem:[#allocation2 + $0xf4] sm:$0xf]
    %v132 = vld [vmem:[#allocation2 + $0xf8] sm:$0xf]
    %v133 = vld [vmem:[#allocation2 + $0xfc] sm:$0xf]
    %v134 = vld [vmem:[#allocation2 + $0x100] sm:$0xf]
    %v135 = vld [vmem:[#allocation2 + $0x104] sm:$0xf]
    %v136 = vld [vmem:[#allocation2 + $0x108] sm:$0xf]
    %v137 = vld [vmem:[#allocation2 + $0x10c] sm:$0xf]
    %v138 = vld [vmem:[#allocation2 + $0x110] sm:$0xf]
    %v139 = vld [vmem:[#allocation2 + $0x114] sm:$0xf]
    %v140 = vld [vmem:[#allocation2 + $0x118] sm:$0xf]
    %v141 = vld [vmem:[#allocation2 + $0x11c] sm:$0xf]
    %v142 = vld [vmem:[#allocation2 + $0x120] sm:$0xf]
    %v143 = vld [vmem:[#allocation2 + $0x124] sm:$0xf]
    %v144 = vld [vmem:[#allocation2 + $0x128] sm:$0xf]
    %v145 = vld [vmem:[#allocation2 + $0x12c] sm:$0xf]
    %v146 = vld [vmem:[#allocation2 + $0x130] sm:$0xf]
    %v147 = vld [vmem:[#allocation2 + $0x134] sm:$0xf]
    %v148 = vld [vmem:[#allocation2 + $0x138] sm:$0xf]
    %v149 = vld [vmem:[#allocation2 + $0x13c] sm:$0xf]
    %v150 = vld [vmem:[#allocation2 + $0x140] sm:$0xf]
    %v151 = vld [vmem:[#allocation2 + $0x144] sm:$0xf]
    %v152 = vld [vmem:[#allocation2 + $0x148] sm:$0xf]
    %v153 = vld [vmem:[#allocation2 + $0x14c] sm:$0xf]
    %v154 = vld [vmem:[#allocation2 + $0x150] sm:$0xf]
    %v155 = vld [vmem:[#allocation2 + $0x154] sm:$0xf]
    %v156 = vld [vmem:[#allocation2 + $0x158] sm:$0xf]
    %v157 = vld [vmem:[#allocation2 + $0x15c] sm:$0xf]
    %v158 = vld [vmem:[#allocation2 + $0x160] sm:$0xf]
    %v159 = vld [vmem:[#allocation2 + $0x164] sm:$0xf]
    %v160 = vld [vmem:[#allocation2 + $0x168] sm:$0xf]
    %v161 = vld [vmem:[#allocation2 + $0x16c] sm:$0xf]
    %v162 = vld [vmem:[#allocation2 + $0x170] sm:$0xf]
    %v163 = vld [vmem:[#allocation2 + $0x174] sm:$0xf]
    %v164 = vld [vmem:[#allocation2 + $0x178] sm:$0xf]
    %v165 = vld [vmem:[#allocation2 + $0x17c] sm:$0xf]
    %v166 = vld [vmem:[#allocation2 + $0x180] sm:$0xf]
    %v167 = vld [vmem:[#allocation2 + $0x184] sm:$0xf]
    %v168 = vld [vmem:[#allocation2 + $0x188] sm:$0xf]
    %v169 = vld [vmem:[#allocation2 + $0x18c] sm:$0xf]
    %v170 = vld [vmem:[#allocation2 + $0x190] sm:$0xf]
    %v171 = vld [vmem:[#allocation2 + $0x194] sm:$0xf]
    %v172 = vld [vmem:[#allocation2 + $0x198] sm:$0xf]
    %v173 = vld [vmem:[#allocation2 + $0x19c] sm:$0xf]
    %v174 = vld [vmem:[#allocation2 + $0x1a0] sm:$0xf]
    %v175 = vld [vmem:[#allocation2 + $0x1a4] sm:$0xf]
    %v176 = vld [vmem:[#allocation2 + $0x1a8] sm:$0xf]
    %v177 = vld [vmem:[#allocation2 + $0x1ac] sm:$0xf]
    %v178 = vld [vmem:[#allocation2 + $0x1b0] sm:$0xf]
    %v179 = vld [vmem:[#allocation2 + $0x1b4] sm:$0xf]
    %v180 = vld [vmem:[#allocation2 + $0x1b8] sm:$0xf]
    %v181 = vld [vmem:[#allocation2 + $0x1bc] sm:$0xf]
    %v182 = vld [vmem:[#allocation2 + $0x1c0] sm:$0xf]
    %v183 = vld [vmem:[#allocation2 + $0x1c4] sm:$0xf]
    %v184 = vld [vmem:[#allocation2 + $0x1c8] sm:$0xf]
    %v185 = vld [vmem:[#allocation2 + $0x1cc] sm:$0xf]
    %v186 = vld [vmem:[#allocation2 + $0x1d0] sm:$0xf]
    %v187 = vld [vmem:[#allocation2 + $0x1d4] sm:$0xf]
    %v188 = vld [vmem:[#allocation2 + $0x1d8] sm:$0xf]
    %v189 = vld [vmem:[#allocation2 + $0x1dc] sm:$0xf]
    %v190 = vld [vmem:[#allocation2 + $0x1e0] sm:$0xf]
    %v191 = vld [vmem:[#allocation2 + $0x1e4] sm:$0xf]
    %v192 = vld [vmem:[#allocation2 + $0x1e8] sm:$0xf]
    %v193 = vld [vmem:[#allocation2 + $0x1ec] sm:$0xf]
    %v194 = vld [vmem:[#allocation2 + $0x1f0] sm:$0xf]
    %v195 = vld [vmem:[#allocation2 + $0x1f4] sm:$0xf]
    %v196 = vld [vmem:[#allocation2 + $0x1f8] sm:$0xf]
    %v197 = vld [vmem:[#allocation2 + $0x1fc] sm:$0xf]
    %v198 = vld [vmem:[#allocation2 + $0x200] sm:$0xf]
    %v199 = vld [vmem:[#allocation2 + $0x204] sm:$0xf]
    %v200 = vld [vmem:[#allocation2 + $0x208] sm:$0xf]
    %v201 = vld [vmem:[#allocation2 + $0x20c] sm:$0xf]
    %v202 = vld [vmem:[#allocation2 + $0x210] sm:$0xf]
    %v203 = vld [vmem:[#allocation2 + $0x214] sm:$0xf]
    %v204 = vld [vmem:[#allocation2 + $0x218] sm:$0xf]
    %v205 = vld [vmem:[#allocation2 + $0x21c] sm:$0xf]
    %v206 = vld [vmem:[#allocation2 + $0x220] sm:$0xf]
    %v207 = vld [vmem:[#allocation2 + $0x224] sm:$0xf]
    %v208 = vld [vmem:[#allocation2 + $0x228] sm:$0xf]
    %v209 = vld [vmem:[#allocation2 + $0x22c] sm:$0xf]
    %v210 = vld [vmem:[#allocation2 + $0x230] sm:$0xf]
    %v211 = vld [vmem:[#allocation2 + $0x234] sm:$0xf]
    %v212 = vld [vmem:[#allocation2 + $0x238] sm:$0xf]
    %v213 = vld [vmem:[#allocation2 + $0x23c] sm:$0xf]
    %v214 = vld [vmem:[#allocation2 + $0x240] sm:$0xf]
    %v215 = vld [vmem:[#allocation2 + $0x244] sm:$0xf]
    %v216 = vld [vmem:[#allocation2 + $0x248] sm:$0xf]
    %v217 = vld [vmem:[#allocation2 + $0x24c] sm:$0xf]
    %v218 = vld [vmem:[#allocation2 + $0x250] sm:$0xf]
    %v219 = vld [vmem:[#allocation2 + $0x254] sm:$0xf]
    %v220 = vld [vmem:[#allocation2 + $0x258] sm:$0xf]
    %v221 = vld [vmem:[#allocation2 + $0x25c] sm:$0xf]
    %v222 = vld [vmem:[#allocation2 + $0x260] sm:$0xf]
    %v223 = vld [vmem:[#allocation2 + $0x264] sm:$0xf]
    %v224 = vld [vmem:[#allocation2 + $0x268] sm:$0xf]
    %v225 = vld [vmem:[#allocation2 + $0x26c] sm:$0xf]
    %v226 = vld [vmem:[#allocation2 + $0x270] sm:$0xf]
    %v227 = vld [vmem:[#allocation2 + $0x274] sm:$0xf]
    %v228 = vld [vmem:[#allocation2 + $0x278] sm:$0xf]
    %v229 = vld [vmem:[#allocation2 + $0x27c] sm:$0xf]
    %v230 = vld [vmem:[#allocation2 + $0x280] sm:$0xf]
    %v231 = vld [vmem:[#allocation2 + $0x284] sm:$0xf]
    %v232 = vld [vmem:[#allocation2 + $0x288] sm:$0xf]
    %v233 = vld [vmem:[#allocation2 + $0x28c] sm:$0xf]
    %v234 = vld [vmem:[#allocation2 + $0x290] sm:$0xf]
    %v235 = vld [vmem:[#allocation2 + $0x294] sm:$0xf]
    %v236 = vld [vmem:[#allocation2 + $0x298] sm:$0xf]
    %v237 = vld [vmem:[#allocation2 + $0x29c] sm:$0xf]
    %v238 = vld [vmem:[#allocation2 + $0x2a0] sm:$0xf]
    %v239 = vld [vmem:[#allocation2 + $0x2a4] sm:$0xf]
    %v240 = vld [vmem:[#allocation2 + $0x2a8] sm:$0xf]
    %v241 = vld [vmem:[#allocation2 + $0x2ac] sm:$0xf]
    %v242 = vld [vmem:[#allocation2 + $0x2b0] sm:$0xf]
    %v243 = vld [vmem:[#allocation2 + $0x2b4] sm:$0xf]
    %v244 = vld [vmem:[#allocation2 + $0x2b8] sm:$0xf]
    %v245 = vld [vmem:[#allocation2 + $0x2bc] sm:$0xf]
    %v246 = vld [vmem:[#allocation2 + $0x2c0] sm:$0xf]
    %v247 = vld [vmem:[#allocation2 + $0x2c4] sm:$0xf]
    %v248 = vld [vmem:[#allocation2 + $0x2c8] sm:$0xf]
    %v249 = vld [vmem:[#allocation2 + $0x2cc] sm:$0xf]
    %v250 = vld [vmem:[#allocation2 + $0x2d0] sm:$0xf]
    %v251 = vld [vmem:[#allocation2 + $0x2d4] sm:$0xf]
    %v252 = vld [vmem:[#allocation2 + $0x2d8] sm:$0xf]
    %v253 = vld [vmem:[#allocation2 + $0x2dc] sm:$0xf]
    %v254 = vld [vmem:[#allocation2 + $0x2e0] sm:$0xf]
    %v255 = vld [vmem:[#allocation2 + $0x2e4] sm:$0xf]
    %v256 = vld [vmem:[#allocation2 + $0x2e8] sm:$0xf]
    %v257 = vld [vmem:[#allocation2 + $0x2ec] sm:$0xf]
    %v258 = vld [vmem:[#allocation2 + $0x2f0] sm:$0xf]
    %v259 = vld [vmem:[#allocation2 + $0x2f4] sm:$0xf]
    %v260 = vld [vmem:[#allocation2 + $0x2f8] sm:$0xf]
    %v261 = vld [vmem:[#allocation2 + $0x2fc] sm:$0xf]
    %v262 = vld [vmem:[#allocation2 + $0x300] sm:$0xf]
    %v263 = vld [vmem:[#allocation2 + $0x304] sm:$0xf]
    %v264 = vld [vmem:[#allocation2 + $0x308] sm:$0xf]
    %v265 = vld [vmem:[#allocation2 + $0x30c] sm:$0xf]
    %v266 = vld [vmem:[#allocation2 + $0x310] sm:$0xf]
    %v267 = vld [vmem:[#allocation2 + $0x314] sm:$0xf]
    %v268 = vld [vmem:[#allocation2 + $0x318] sm:$0xf]
    %v269 = vld [vmem:[#allocation2 + $0x31c] sm:$0xf]
    %v270 = vld [vmem:[#allocation2 + $0x320] sm:$0xf]
    %v271 = vld [vmem:[#allocation2 + $0x324] sm:$0xf]
    %v272 = vld [vmem:[#allocation2 + $0x328] sm:$0xf]
    %v273 = vld [vmem:[#allocation2 + $0x32c] sm:$0xf]
    %v274 = vld [vmem:[#allocation2 + $0x330] sm:$0xf]
    %v275 = vld [vmem:[#allocation2 + $0x334] sm:$0xf]
    %v276 = vld [vmem:[#allocation2 + $0x338] sm:$0xf]
    %v277 = vld [vmem:[#allocation2 + $0x33c] sm:$0xf]
    %v278 = vld [vmem:[#allocation2 + $0x340] sm:$0xf]
    %v279 = vld [vmem:[#allocation2 + $0x344] sm:$0xf]
    %v280 = vld [vmem:[#allocation2 + $0x348] sm:$0xf]
    %v281 = vld [vmem:[#allocation2 + $0x34c] sm:$0xf]
    %v282 = vld [vmem:[#allocation2 + $0x350] sm:$0xf]
    %v283 = vld [vmem:[#allocation2 + $0x354] sm:$0xf]
    %v284 = vld [vmem:[#allocation2 + $0x358] sm:$0xf]
    %v285 = vld [vmem:[#allocation2 + $0x35c] sm:$0xf]
    %v286 = vld [vmem:[#allocation2 + $0x360] sm:$0xf]
    %v287 = vld [vmem:[#allocation2 + $0x364] sm:$0xf]
    %v288 = vld [vmem:[#allocation2 + $0x368] sm:$0xf]
    %v289 = vld [vmem:[#allocation2 + $0x36c] sm:$0xf]
    %v290 = vld [vmem:[#allocation2 + $0x370] sm:$0xf]
    %v291 = vld [vmem:[#allocation2 + $0x374] sm:$0xf]
    %v292 = vld [vmem:[#allocation2 + $0x378] sm:$0xf]
    %v293 = vld [vmem:[#allocation2 + $0x37c] sm:$0xf]
    %v294 = vld [vmem:[#allocation2 + $0x380] sm:$0xf]
    %v295 = vld [vmem:[#allocation2 + $0x384] sm:$0xf]
    %v296 = vld [vmem:[#allocation2 + $0x388] sm:$0xf]
    %v297 = vld [vmem:[#allocation2 + $0x38c] sm:$0xf]
    %v298 = vld [vmem:[#allocation2 + $0x390] sm:$0xf]
    %v299 = vld [vmem:[#allocation2 + $0x394] sm:$0xf]
    %v300 = vld [vmem:[#allocation2 + $0x398] sm:$0xf]
    %v301 = vld [vmem:[#allocation2 + $0x39c] sm:$0xf]
    %v302 = vld [vmem:[#allocation2 + $0x3a0] sm:$0xf]
    %v303 = vld [vmem:[#allocation2 + $0x3a4] sm:$0xf]
    %v304 = vld [vmem:[#allocation2 + $0x3a8] sm:$0xf]
    %v305 = vld [vmem:[#allocation2 + $0x3ac] sm:$0xf]
    %v306 = vld [vmem:[#allocation2 + $0x3b0] sm:$0xf]
    %v307 = vld [vmem:[#allocation2 + $0x3b4] sm:$0xf]
    %v308 = vld [vmem:[#allocation2 + $0x3b8] sm:$0xf]
    %v309 = vld [vmem:[#allocation2 + $0x3bc] sm:$0xf]
    %v310 = vld [vmem:[#allocation2 + $0x3c0] sm:$0xf]
    %v311 = vld [vmem:[#allocation2 + $0x3c4] sm:$0xf]
    %v312 = vld [vmem:[#allocation2 + $0x3c8] sm:$0xf]
    %v313 = vld [vmem:[#allocation2 + $0x3cc] sm:$0xf]
    %v314 = vld [vmem:[#allocation2 + $0x3d0] sm:$0xf]
    %v315 = vld [vmem:[#allocation2 + $0x3d4] sm:$0xf]
    %v316 = vld [vmem:[#allocation2 + $0x3d8] sm:$0xf]
    %v317 = vld [vmem:[#allocation2 + $0x3dc] sm:$0xf]
    %v318 = vld [vmem:[#allocation2 + $0x3e0] sm:$0xf]
    %v319 = vld [vmem:[#allocation2 + $0x3e4] sm:$0xf]
    %v320 = vld [vmem:[#allocation2 + $0x3e8] sm:$0xf]
    %v321 = vld [vmem:[#allocation2 + $0x3ec] sm:$0xf]
    %v322 = vld [vmem:[#allocation2 + $0x3f0] sm:$0xf]
    %v323 = vld [vmem:[#allocation2 + $0x3f4] sm:$0xf]
    %v324 = vld [vmem:[#allocation2 + $0x3f8] sm:$0xf]
    %v325 = vld [vmem:[#allocation2 + $0x3fc] sm:$0xf]
    %v326 = vld [vmem:[#allocation2 + $0x400] sm:$0xf]
    %v327 = vld [vmem:[#allocation2 + $0x404] sm:$0xf]
    %v328 = vld [vmem:[#allocation2 + $0x408] sm:$0xf]
    %v329 = vld [vmem:[#allocation2 + $0x40c] sm:$0xf]
    %v330 = vld [vmem:[#allocation2 + $0x410] sm:$0xf]
    %v331 = vld [vmem:[#allocation2 + $0x414] sm:$0xf]
    %v332 = vld [vmem:[#allocation2 + $0x418] sm:$0xf]
    %v333 = vld [vmem:[#allocation2 + $0x41c] sm:$0xf]
    %v334 = vld [vmem:[#allocation2 + $0x420] sm:$0xf]
    %v335 = vld [vmem:[#allocation2 + $0x424] sm:$0xf]
    %v336 = vld [vmem:[#allocation2 + $0x428] sm:$0xf]
    %v337 = vld [vmem:[#allocation2 + $0x42c] sm:$0xf]
    %v338 = vld [vmem:[#allocation2 + $0x430] sm:$0xf]
    %v339 = vld [vmem:[#allocation2 + $0x434] sm:$0xf]
    %v340 = vld [vmem:[#allocation2 + $0x438] sm:$0xf]
    %v341 = vld [vmem:[#allocation2 + $0x43c] sm:$0xf]
    %v342 = vld [vmem:[#allocation2 + $0x440] sm:$0xf]
    %v343 = vld [vmem:[#allocation2 + $0x444] sm:$0xf]
    %v344 = vld [vmem:[#allocation2 + $0x448] sm:$0xf]
    %v345 = vld [vmem:[#allocation2 + $0x44c] sm:$0xf]
    %v346 = vld [vmem:[#allocation2 + $0x450] sm:$0xf]
    %v347 = vld [vmem:[#allocation2 + $0x454] sm:$0xf]
    %v348 = vld [vmem:[#allocation2 + $0x458] sm:$0xf]
    %v349 = vld [vmem:[#allocation2 + $0x45c] sm:$0xf]
    %v350 = vld [vmem:[#allocation2 + $0x460] sm:$0xf]
    %v351 = vld [vmem:[#allocation2 + $0x464] sm:$0xf]
    %v352 = vld [vmem:[#allocation2 + $0x468] sm:$0xf]
    %v353 = vld [vmem:[#allocation2 + $0x46c] sm:$0xf]
    %v354 = vld [vmem:[#allocation2 + $0x470] sm:$0xf]
    %v355 = vld [vmem:[#allocation2 + $0x474] sm:$0xf]
    %v356 = vld [vmem:[#allocation2 + $0x478] sm:$0xf]
    %v357 = vld [vmem:[#allocation2 + $0x47c] sm:$0xf]
    %v358 = vld [vmem:[#allocation2 + $0x480] sm:$0xf]
    %v359 = vld [vmem:[#allocation2 + $0x484] sm:$0xf]
    %v360 = vld [vmem:[#allocation2 + $0x488] sm:$0xf]
    %v361 = vld [vmem:[#allocation2 + $0x48c] sm:$0xf]
    %v362 = vld [vmem:[#allocation2 + $0x490] sm:$0xf]
    %v363 = vld [vmem:[#allocation2 + $0x494] sm:$0xf]
    %v364 = vld [vmem:[#allocation2 + $0x498] sm:$0xf]
    %v365 = vld [vmem:[#allocation2 + $0x49c] sm:$0xf]
    %v366 = vld [vmem:[#allocation2 + $0x4a0] sm:$0xf]
    %v367 = vld [vmem:[#allocation2 + $0x4a4] sm:$0xf]
    %v368 = vld [vmem:[#allocation2 + $0x4a8] sm:$0xf]
    %v369 = vld [vmem:[#allocation2 + $0x4ac] sm:$0xf]
    %v370 = vld [vmem:[#allocation2 + $0x4b0] sm:$0xf]
    %v371 = vld [vmem:[#allocation2 + $0x4b4] sm:$0xf]
    %v372 = vld [vmem:[#allocation2 + $0x4b8] sm:$0xf]
    %v373 = vld [vmem:[#allocation2 + $0x4bc] sm:$0xf]
    %v374 = vld [vmem:[#allocation2 + $0x4c0] sm:$0xf]
    %v375 = vld [vmem:[#allocation2 + $0x4c4] sm:$0xf]
    %v376 = vld [vmem:[#allocation2 + $0x4c8] sm:$0xf]
    %v377 = vld [vmem:[#allocation2 + $0x4cc] sm:$0xf]
    %v378 = vld [vmem:[#allocation2 + $0x4d0] sm:$0xf]
    %v379 = vld [vmem:[#allocation2 + $0x4d4] sm:$0xf]
    %v380 = vld [vmem:[#allocation2 + $0x4d8] sm:$0xf]
    %v381 = vld [vmem:[#allocation2 + $0x4dc] sm:$0xf]
    %v382 = vld [vmem:[#allocation2 + $0x4e0] sm:$0xf]
    %v383 = vld [vmem:[#allocation2 + $0x4e4] sm:$0xf]
    %v384 = vld [vmem:[#allocation2 + $0x4e8] sm:$0xf]
    %v385 = vld [vmem:[#allocation2 + $0x4ec] sm:$0xf]
    %v386 = vld [vmem:[#allocation2 + $0x4f0] sm:$0xf]
    %v387 = vld [vmem:[#allocation2 + $0x4f4] sm:$0xf]
    %v388 = vld [vmem:[#allocation2 + $0x4f8] sm:$0xf]
    %v389 = vld [vmem:[#allocation2 + $0x4fc] sm:$0xf]
    %v390 = vld [vmem:[#allocation2 + $0x500] sm:$0xf]
    %v391 = vld [vmem:[#allocation2 + $0x504] sm:$0xf]
    %v392 = vld [vmem:[#allocation2 + $0x508] sm:$0xf]
    %v393 = vld [vmem:[#allocation2 + $0x50c] sm:$0xf]
    %v394 = vld [vmem:[#allocation2 + $0x510] sm:$0xf]
    %v395 = vld [vmem:[#allocation2 + $0x514] sm:$0xf]
    %v396 = vld [vmem:[#allocation2 + $0x518] sm:$0xf]
    %v397 = vld [vmem:[#allocation2 + $0x51c] sm:$0xf]
    %v398 = vld [vmem:[#allocation2 + $0x520] sm:$0xf]
    %v399 = vld [vmem:[#allocation2 + $0x524] sm:$0xf]
    %v400 = vld [vmem:[#allocation2 + $0x528] sm:$0xf]
    %v401 = vld [vmem:[#allocation2 + $0x52c] sm:$0xf]
    %v402 = vld [vmem:[#allocation2 + $0x530] sm:$0xf]
    %v403 = vld [vmem:[#allocation2 + $0x534] sm:$0xf]
    %v404 = vld [vmem:[#allocation2 + $0x538] sm:$0xf]
    %v405 = vld [vmem:[#allocation2 + $0x53c] sm:$0xf]
    %v406 = vld [vmem:[#allocation2 + $0x540] sm:$0xf]
    %v407 = vld [vmem:[#allocation2 + $0x544] sm:$0xf]
    %v408 = vld [vmem:[#allocation2 + $0x548] sm:$0xf]
    %v409 = vld [vmem:[#allocation2 + $0x54c] sm:$0xf]
    %v410 = vld [vmem:[#allocation2 + $0x550] sm:$0xf]
    %v411 = vld [vmem:[#allocation2 + $0x554] sm:$0xf]
    %v412 = vld [vmem:[#allocation2 + $0x558] sm:$0xf]
    %v413 = vld [vmem:[#allocation2 + $0x55c] sm:$0xf]
    %v414 = vld [vmem:[#allocation2 + $0x560] sm:$0xf]
    %v415 = vld [vmem:[#allocation2 + $0x564] sm:$0xf]
    %v416 = vld [vmem:[#allocation2 + $0x568] sm:$0xf]
    %v417 = vld [vmem:[#allocation2 + $0x56c] sm:$0xf]
    %v418 = vld [vmem:[#allocation2 + $0x570] sm:$0xf]
    %v419 = vld [vmem:[#allocation2 + $0x574] sm:$0xf]
    %v420 = vld [vmem:[#allocation2 + $0x578] sm:$0xf]
    %v421 = vld [vmem:[#allocation2 + $0x57c] sm:$0xf]
    %v422 = vld [vmem:[#allocation2 + $0x580] sm:$0xf]
    %v423 = vld [vmem:[#allocation2 + $0x584] sm:$0xf]
    %v424 = vld [vmem:[#allocation2 + $0x588] sm:$0xf]
    %v425 = vld [vmem:[#allocation2 + $0x58c] sm:$0xf]
    %v426 = vld [vmem:[#allocation2 + $0x590] sm:$0xf]
    %v427 = vld [vmem:[#allocation2 + $0x594] sm:$0xf]
    %v428 = vld [vmem:[#allocation2 + $0x598] sm:$0xf]
    %v429 = vld [vmem:[#allocation2 + $0x59c] sm:$0xf]
    %v430 = vld [vmem:[#allocation2 + $0x5a0] sm:$0xf]
    %v431 = vld [vmem:[#allocation2 + $0x5a4] sm:$0xf]
    %v432 = vld [vmem:[#allocation2 + $0x5a8] sm:$0xf]
    %v433 = vld [vmem:[#allocation2 + $0x5ac] sm:$0xf]
    %v434 = vld [vmem:[#allocation2 + $0x5b0] sm:$0xf]
    %v435 = vld [vmem:[#allocation2 + $0x5b4] sm:$0xf]
    %v436 = vld [vmem:[#allocation2 + $0x5b8] sm:$0xf]
    %v437 = vld [vmem:[#allocation2 + $0x5bc] sm:$0xf]
    %v438 = vld [vmem:[#allocation2 + $0x5c0] sm:$0xf]
    %v439 = vld [vmem:[#allocation2 + $0x5c4] sm:$0xf]
    %v440 = vld [vmem:[#allocation2 + $0x5c8] sm:$0xf]
    %v441 = vld [vmem:[#allocation2 + $0x5cc] sm:$0xf]
    %v442 = vld [vmem:[#allocation2 + $0x5d0] sm:$0xf]
    %v443 = vld [vmem:[#allocation2 + $0x5d4] sm:$0xf]
    %v444 = vld [vmem:[#allocation2 + $0x5d8] sm:$0xf]
    %v445 = vld [vmem:[#allocation2 + $0x5dc] sm:$0xf]
    %v446 = vld [vmem:[#allocation2 + $0x5e0] sm:$0xf]
    %v447 = vld [vmem:[#allocation2 + $0x5e4] sm:$0xf]
    %v448 = vld [vmem:[#allocation2 + $0x5e8] sm:$0xf]
    %v449 = vld [vmem:[#allocation2 + $0x5ec] sm:$0xf]
    %v450 = vld [vmem:[#allocation2 + $0x5f0] sm:$0xf]
    %v451 = vld [vmem:[#allocation2 + $0x5f4] sm:$0xf]
    %v452 = vld [vmem:[#allocation2 + $0x5f8] sm:$0xf]
    %v453 = vld [vmem:[#allocation2 + $0x5fc] sm:$0xf]
    %v454 = vld [vmem:[#allocation2 + $0x600] sm:$0xf]
    %v455 = vld [vmem:[#allocation2 + $0x604] sm:$0xf]
    %v456 = vld [vmem:[#allocation2 + $0x608] sm:$0xf]
    %v457 = vld [vmem:[#allocation2 + $0x60c] sm:$0xf]
    %v458 = vld [vmem:[#allocation2 + $0x610] sm:$0xf]
    %v459 = vld [vmem:[#allocation2 + $0x614] sm:$0xf]
    %v460 = vld [vmem:[#allocation2 + $0x618] sm:$0xf]
    %v461 = vld [vmem:[#allocation2 + $0x61c] sm:$0xf]
    %v462 = vld [vmem:[#allocation2 + $0x620] sm:$0xf]
    %v463 = vld [vmem:[#allocation2 + $0x624] sm:$0xf]
    %v464 = vld [vmem:[#allocation2 + $0x628] sm:$0xf]
    %v465 = vld [vmem:[#allocation2 + $0x62c] sm:$0xf]
    %v466 = vld [vmem:[#allocation2 + $0x630] sm:$0xf]
    %v467 = vld [vmem:[#allocation2 + $0x634] sm:$0xf]
    %v468 = vld [vmem:[#allocation2 + $0x638] sm:$0xf]
    %v469 = vld [vmem:[#allocation2 + $0x63c] sm:$0xf]
    %v470 = vld [vmem:[#allocation2 + $0x640] sm:$0xf]
    %v471 = vld [vmem:[#allocation2 + $0x644] sm:$0xf]
    %v472 = vld [vmem:[#allocation2 + $0x648] sm:$0xf]
    %v473 = vld [vmem:[#allocation2 + $0x64c] sm:$0xf]
    %v474 = vld [vmem:[#allocation2 + $0x650] sm:$0xf]
    %v475 = vld [vmem:[#allocation2 + $0x654] sm:$0xf]
    %v476 = vld [vmem:[#allocation2 + $0x658] sm:$0xf]
    %v477 = vld [vmem:[#allocation2 + $0x65c] sm:$0xf]
    %v478 = vld [vmem:[#allocation2 + $0x660] sm:$0xf]
    %v479 = vld [vmem:[#allocation2 + $0x664] sm:$0xf]
    %v480 = vld [vmem:[#allocation2 + $0x668] sm:$0xf]
    %v481 = vld [vmem:[#allocation2 + $0x66c] sm:$0xf]
    %v482 = vld [vmem:[#allocation2 + $0x670] sm:$0xf]
    %v483 = vld [vmem:[#allocation2 + $0x674] sm:$0xf]
    %v484 = vld [vmem:[#allocation2 + $0x678] sm:$0xf]
    %v485 = vld [vmem:[#allocation2 + $0x67c] sm:$0xf]
    %v486 = vld [vmem:[#allocation4] sm:$0x1]
    %v488 = vperm.slane %v486, 0
    %v516 = vunpack.c.l.b16 %v44
    %v517 = vunpack.c.h.b16 %v44
    %v518 = vunpack.c.l.b16 %v45
    %v519 = vunpack.c.h.b16 %v45
    %v520 = vunpack.c.l.b16 %v46
    %v521 = vunpack.c.h.b16 %v46
    %v522 = vunpack.c.l.b16 %v47
    %v523 = vunpack.c.h.b16 %v47
    %v524 = vunpack.c.l.b16 %v48
    %v525 = vunpack.c.h.b16 %v48
    %v526 = vunpack.c.l.b16 %v49
    %v527 = vunpack.c.h.b16 %v49
    %v528 = vunpack.c.l.b16 %v50
    %v529 = vunpack.c.h.b16 %v50
    %v530 = vunpack.c.l.b16 %v51
    %v531 = vunpack.c.h.b16 %v51
    %v532 = vunpack.c.l.b16 %v52
    %v533 = vunpack.c.h.b16 %v52
    %v534 = vunpack.c.l.b16 %v53
    %v535 = vunpack.c.h.b16 %v53
    %v536 = vunpack.c.l.b16 %v54
    %v537 = vunpack.c.h.b16 %v54
    %v538 = vunpack.c.l.b16 %v55
    %v539 = vunpack.c.h.b16 %v55
    %v540 = vunpack.c.l.b16 %v56
    %v541 = vunpack.c.h.b16 %v56
    %v542 = vunpack.c.l.b16 %v57
    %v543 = vunpack.c.h.b16 %v57
    %v544 = vunpack.c.l.b16 %v58
    %v545 = vunpack.c.h.b16 %v58
    %v546 = vunpack.c.l.b16 %v59
    %v547 = vunpack.c.h.b16 %v59
    %v548 = vunpack.c.l.b16 %v60
    %v549 = vunpack.c.h.b16 %v60
    %v550 = vunpack.c.l.b16 %v61
    %v551 = vunpack.c.h.b16 %v61
    %v552 = vunpack.c.l.b16 %v62
    %v553 = vunpack.c.h.b16 %v62
    %v554 = vunpack.c.l.b16 %v63
    %v555 = vunpack.c.h.b16 %v63
    %v556 = vunpack.c.l.b16 %v64
    %v557 = vunpack.c.h.b16 %v64
    %v558 = vunpack.c.l.b16 %v65
    %v559 = vunpack.c.h.b16 %v65
    %v560 = vunpack.c.l.b16 %v66
    %v561 = vunpack.c.h.b16 %v66
    %v562 = vunpack.c.l.b16 %v67
    %v563 = vunpack.c.h.b16 %v67
    %v564 = vunpack.c.l.b16 %v68
    %v565 = vunpack.c.h.b16 %v68
    %v566 = vunpack.c.l.b16 %v69
    %v567 = vunpack.c.h.b16 %v69
    %v568 = vpack.c.b16 %v542, %v516
    %v569 = vpack.c.b16 %v543, %v517
    %v570 = vpack.c.b16 %v544, %v518
    %v571 = vpack.c.b16 %v545, %v519
    %v572 = vpack.c.b16 %v546, %v520
    %v573 = vpack.c.b16 %v547, %v521
    %v574 = vpack.c.b16 %v548, %v522
    %v575 = vpack.c.b16 %v549, %v523
    %v576 = vpack.c.b16 %v550, %v524
    %v577 = vpack.c.b16 %v551, %v525
    %v578 = vpack.c.b16 %v552, %v526
    %v579 = vpack.c.b16 %v553, %v527
    %v580 = vpack.c.b16 %v554, %v528
    %v581 = vpack.c.b16 %v555, %v529
    %v582 = vpack.c.b16 %v556, %v530
    %v583 = vpack.c.b16 %v557, %v531
    %v584 = vpack.c.b16 %v558, %v532
    %v585 = vpack.c.b16 %v559, %v533
    %v586 = vpack.c.b16 %v560, %v534
    %v587 = vpack.c.b16 %v561, %v535
    %v588 = vpack.c.b16 %v562, %v536
    %v589 = vpack.c.b16 %v563, %v537
    %v590 = vpack.c.b16 %v564, %v538
    %v591 = vpack.c.b16 %v565, %v539
    %v592 = vpack.c.b16 %v566, %v540
    %v593 = vpack.c.b16 %v567, %v541
    %v1036 = vunpack.c.l.b16 %v70
    %v1037 = vunpack.c.l.b16 %v71
    %v1038 = vunpack.c.l.b16 %v72
    %v1039 = vunpack.c.l.b16 %v73
    %v1040 = vunpack.c.l.b16 %v74
    %v1041 = vunpack.c.l.b16 %v75
    %v1042 = vunpack.c.l.b16 %v76
    %v1043 = vunpack.c.l.b16 %v77
    %v1044 = vunpack.c.l.b16 %v78
    %v1045 = vunpack.c.l.b16 %v79
    %v1046 = vunpack.c.l.b16 %v80
    %v1047 = vunpack.c.l.b16 %v81
    %v1048 = vunpack.c.l.b16 %v82
    %v1049 = vunpack.c.l.b16 %v83
    %v1050 = vunpack.c.l.b16 %v84
    %v1051 = vunpack.c.l.b16 %v85
    %v1052 = vunpack.c.l.b16 %v86
    %v1053 = vunpack.c.l.b16 %v87
    %v1054 = vunpack.c.l.b16 %v88
    %v1055 = vunpack.c.l.b16 %v89
    %v1056 = vunpack.c.l.b16 %v90
    %v1057 = vunpack.c.l.b16 %v91
    %v1058 = vunpack.c.l.b16 %v92
    %v1059 = vunpack.c.l.b16 %v93
    %v1060 = vunpack.c.l.b16 %v94
    %v1061 = vunpack.c.l.b16 %v95
    %v1062 = vunpack.c.l.b16 %v96
    %v1063 = vunpack.c.l.b16 %v97
    %v1064 = vunpack.c.l.b16 %v98
    %v1065 = vunpack.c.l.b16 %v99
    %v1066 = vunpack.c.l.b16 %v100
    %v1067 = vunpack.c.l.b16 %v101
    %v1068 = vunpack.c.l.b16 %v102
    %v1069 = vunpack.c.l.b16 %v103
    %v1070 = vunpack.c.l.b16 %v104
    %v1071 = vunpack.c.l.b16 %v105
    %v1072 = vunpack.c.l.b16 %v106
    %v1073 = vunpack.c.l.b16 %v107
    %v1074 = vunpack.c.l.b16 %v108
    %v1075 = vunpack.c.l.b16 %v109
    %v1076 = vunpack.c.l.b16 %v110
    %v1077 = vunpack.c.l.b16 %v111
    %v1078 = vunpack.c.l.b16 %v112
    %v1079 = vunpack.c.l.b16 %v113
    %v1080 = vunpack.c.l.b16 %v114
    %v1081 = vunpack.c.l.b16 %v115
    %v1082 = vunpack.c.l.b16 %v116
    %v1083 = vunpack.c.l.b16 %v117
    %v1084 = vunpack.c.l.b16 %v118
    %v1085 = vunpack.c.l.b16 %v119
    %v1086 = vunpack.c.l.b16 %v120
    %v1087 = vunpack.c.l.b16 %v121
    %v1088 = vunpack.c.l.b16 %v122
    %v1089 = vunpack.c.l.b16 %v123
    %v1090 = vunpack.c.l.b16 %v124
    %v1091 = vunpack.c.l.b16 %v125
    %v1092 = vunpack.c.l.b16 %v126
    %v1093 = vunpack.c.l.b16 %v127
    %v1094 = vunpack.c.l.b16 %v128
    %v1095 = vunpack.c.l.b16 %v129
    %v1096 = vunpack.c.l.b16 %v130
    %v1097 = vunpack.c.l.b16 %v131
    %v1098 = vunpack.c.l.b16 %v132
    %v1099 = vunpack.c.l.b16 %v133
    %v1100 = vunpack.c.l.b16 %v134
    %v1101 = vunpack.c.l.b16 %v135
    %v1102 = vunpack.c.l.b16 %v136
    %v1103 = vunpack.c.l.b16 %v137
    %v1104 = vunpack.c.l.b16 %v138
    %v1105 = vunpack.c.l.b16 %v139
    %v1106 = vunpack.c.l.b16 %v140
    %v1107 = vunpack.c.l.b16 %v141
    %v1108 = vunpack.c.l.b16 %v142
    %v1109 = vunpack.c.l.b16 %v143
    %v1110 = vunpack.c.l.b16 %v144
    %v1111 = vunpack.c.l.b16 %v145
    %v1112 = vunpack.c.l.b16 %v146
    %v1113 = vunpack.c.l.b16 %v147
    %v1114 = vunpack.c.l.b16 %v148
    %v1115 = vunpack.c.l.b16 %v149
    %v1116 = vunpack.c.l.b16 %v150
    %v1117 = vunpack.c.l.b16 %v151
    %v1118 = vunpack.c.l.b16 %v152
    %v1119 = vunpack.c.l.b16 %v153
    %v1120 = vunpack.c.l.b16 %v154
    %v1121 = vunpack.c.l.b16 %v155
    %v1122 = vunpack.c.l.b16 %v156
    %v1123 = vunpack.c.l.b16 %v157
    %v1124 = vunpack.c.l.b16 %v158
    %v1125 = vunpack.c.l.b16 %v159
    %v1126 = vunpack.c.l.b16 %v160
    %v1127 = vunpack.c.l.b16 %v161
    %v1128 = vunpack.c.l.b16 %v162
    %v1129 = vunpack.c.l.b16 %v163
    %v1130 = vunpack.c.l.b16 %v164
    %v1131 = vunpack.c.l.b16 %v165
    %v1132 = vunpack.c.l.b16 %v166
    %v1133 = vunpack.c.l.b16 %v167
    %v1134 = vunpack.c.l.b16 %v168
    %v1135 = vunpack.c.l.b16 %v169
    %v1136 = vunpack.c.l.b16 %v170
    %v1137 = vunpack.c.l.b16 %v171
    %v1138 = vunpack.c.l.b16 %v172
    %v1139 = vunpack.c.l.b16 %v173
    %v1140 = vunpack.c.l.b16 %v174
    %v1141 = vunpack.c.l.b16 %v175
    %v1142 = vunpack.c.l.b16 %v176
    %v1143 = vunpack.c.l.b16 %v177
    %v1144 = vunpack.c.l.b16 %v178
    %v1145 = vunpack.c.l.b16 %v179
    %v1146 = vunpack.c.l.b16 %v180
    %v1147 = vunpack.c.l.b16 %v181
    %v1148 = vunpack.c.l.b16 %v182
    %v1149 = vunpack.c.l.b16 %v183
    %v1150 = vunpack.c.l.b16 %v184
    %v1151 = vunpack.c.l.b16 %v185
    %v1152 = vunpack.c.l.b16 %v186
    %v1153 = vunpack.c.l.b16 %v187
    %v1154 = vunpack.c.l.b16 %v188
    %v1155 = vunpack.c.l.b16 %v189
    %v1156 = vunpack.c.l.b16 %v190
    %v1157 = vunpack.c.l.b16 %v191
    %v1158 = vunpack.c.l.b16 %v192
    %v1159 = vunpack.c.l.b16 %v193
    %v1160 = vunpack.c.l.b16 %v194
    %v1161 = vunpack.c.l.b16 %v195
    %v1162 = vunpack.c.l.b16 %v196
    %v1163 = vunpack.c.l.b16 %v197
    %v1164 = vunpack.c.l.b16 %v198
    %v1165 = vunpack.c.l.b16 %v199
    %v1166 = vunpack.c.l.b16 %v200
    %v1167 = vunpack.c.l.b16 %v201
    %v1168 = vunpack.c.l.b16 %v202
    %v1169 = vunpack.c.l.b16 %v203
    %v1170 = vunpack.c.l.b16 %v204
    %v1171 = vunpack.c.l.b16 %v205
    %v1172 = vunpack.c.l.b16 %v206
    %v1173 = vunpack.c.l.b16 %v207
    %v1174 = vunpack.c.l.b16 %v208
    %v1175 = vunpack.c.l.b16 %v209
    %v1176 = vunpack.c.l.b16 %v210
    %v1177 = vunpack.c.l.b16 %v211
    %v1178 = vunpack.c.l.b16 %v212
    %v1179 = vunpack.c.l.b16 %v213
    %v1180 = vunpack.c.l.b16 %v214
    %v1181 = vunpack.c.l.b16 %v215
    %v1182 = vunpack.c.l.b16 %v216
    %v1183 = vunpack.c.l.b16 %v217
    %v1184 = vunpack.c.l.b16 %v218
    %v1185 = vunpack.c.l.b16 %v219
    %v1186 = vunpack.c.l.b16 %v220
    %v1187 = vunpack.c.l.b16 %v221
    %v1188 = vunpack.c.l.b16 %v222
    %v1189 = vunpack.c.l.b16 %v223
    %v1190 = vunpack.c.l.b16 %v224
    %v1191 = vunpack.c.l.b16 %v225
    %v1192 = vunpack.c.l.b16 %v226
    %v1193 = vunpack.c.l.b16 %v227
    %v1194 = vunpack.c.l.b16 %v228
    %v1195 = vunpack.c.l.b16 %v229
    %v1196 = vunpack.c.l.b16 %v230
    %v1197 = vunpack.c.l.b16 %v231
    %v1198 = vunpack.c.l.b16 %v232
    %v1199 = vunpack.c.l.b16 %v233
    %v1200 = vunpack.c.l.b16 %v234
    %v1201 = vunpack.c.l.b16 %v235
    %v1202 = vunpack.c.l.b16 %v236
    %v1203 = vunpack.c.l.b16 %v237
    %v1204 = vunpack.c.l.b16 %v238
    %v1205 = vunpack.c.l.b16 %v239
    %v1206 = vunpack.c.l.b16 %v240
    %v1207 = vunpack.c.l.b16 %v241
    %v1208 = vunpack.c.l.b16 %v242
    %v1209 = vunpack.c.l.b16 %v243
    %v1210 = vunpack.c.l.b16 %v244
    %v1211 = vunpack.c.l.b16 %v245
    %v1212 = vunpack.c.l.b16 %v246
    %v1213 = vunpack.c.l.b16 %v247
    %v1214 = vunpack.c.l.b16 %v248
    %v1215 = vunpack.c.l.b16 %v249
    %v1216 = vunpack.c.l.b16 %v250
    %v1217 = vunpack.c.l.b16 %v251
    %v1218 = vunpack.c.l.b16 %v252
    %v1219 = vunpack.c.l.b16 %v253
    %v1220 = vunpack.c.l.b16 %v254
    %v1221 = vunpack.c.l.b16 %v255
    %v1222 = vunpack.c.l.b16 %v256
    %v1223 = vunpack.c.l.b16 %v257
    %v1224 = vunpack.c.l.b16 %v258
    %v1225 = vunpack.c.l.b16 %v259
    %v1226 = vunpack.c.l.b16 %v260
    %v1227 = vunpack.c.l.b16 %v261
    %v1228 = vunpack.c.l.b16 %v262
    %v1229 = vunpack.c.l.b16 %v263
    %v1230 = vunpack.c.l.b16 %v264
    %v1231 = vunpack.c.l.b16 %v265
    %v1232 = vunpack.c.l.b16 %v266
    %v1233 = vunpack.c.l.b16 %v267
    %v1234 = vunpack.c.l.b16 %v268
    %v1235 = vunpack.c.l.b16 %v269
    %v1236 = vunpack.c.l.b16 %v270
    %v1237 = vunpack.c.l.b16 %v271
    %v1238 = vunpack.c.l.b16 %v272
    %v1239 = vunpack.c.l.b16 %v273
    %v1240 = vunpack.c.l.b16 %v274
    %v1241 = vunpack.c.l.b16 %v275
    %v1242 = vunpack.c.l.b16 %v276
    %v1243 = vunpack.c.l.b16 %v277
    %v1244 = vunpack.c.l.b16 %v278
    %v1245 = vunpack.c.l.b16 %v279
    %v1246 = vunpack.c.l.b16 %v280
    %v1247 = vunpack.c.l.b16 %v281
    %v1248 = vunpack.c.l.b16 %v282
    %v1249 = vunpack.c.l.b16 %v283
    %v1250 = vunpack.c.l.b16 %v284
    %v1251 = vunpack.c.l.b16 %v285
    %v1252 = vunpack.c.l.b16 %v286
    %v1253 = vunpack.c.l.b16 %v287
    %v1254 = vunpack.c.l.b16 %v288
    %v1255 = vunpack.c.l.b16 %v289
    %v1256 = vunpack.c.l.b16 %v290
    %v1257 = vunpack.c.l.b16 %v291
    %v1258 = vunpack.c.l.b16 %v292
    %v1259 = vunpack.c.l.b16 %v293
    %v1260 = vunpack.c.l.b16 %v294
    %v1261 = vunpack.c.l.b16 %v295
    %v1262 = vunpack.c.l.b16 %v296
    %v1263 = vunpack.c.l.b16 %v297
    %v1264 = vunpack.c.l.b16 %v298
    %v1265 = vunpack.c.l.b16 %v299
    %v1266 = vunpack.c.l.b16 %v300
    %v1267 = vunpack.c.l.b16 %v301
    %v1268 = vunpack.c.l.b16 %v302
    %v1269 = vunpack.c.l.b16 %v303
    %v1270 = vunpack.c.l.b16 %v304
    %v1271 = vunpack.c.l.b16 %v305
    %v1272 = vunpack.c.l.b16 %v306
    %v1273 = vunpack.c.l.b16 %v307
    %v1274 = vunpack.c.l.b16 %v308
    %v1275 = vunpack.c.l.b16 %v309
    %v1276 = vunpack.c.l.b16 %v310
    %v1277 = vunpack.c.l.b16 %v311
    %v1278 = vunpack.c.l.b16 %v312
    %v1279 = vunpack.c.l.b16 %v313
    %v1280 = vunpack.c.l.b16 %v314
    %v1281 = vunpack.c.l.b16 %v315
    %v1282 = vunpack.c.l.b16 %v316
    %v1283 = vunpack.c.l.b16 %v317
    %v1284 = vunpack.c.l.b16 %v318
    %v1285 = vunpack.c.l.b16 %v319
    %v1286 = vunpack.c.l.b16 %v320
    %v1287 = vunpack.c.l.b16 %v321
    %v1288 = vunpack.c.l.b16 %v322
    %v1289 = vunpack.c.l.b16 %v323
    %v1290 = vunpack.c.l.b16 %v324
    %v1291 = vunpack.c.l.b16 %v325
    %v1292 = vunpack.c.l.b16 %v326
    %v1293 = vunpack.c.l.b16 %v327
    %v1294 = vunpack.c.l.b16 %v328
    %v1295 = vunpack.c.l.b16 %v329
    %v1296 = vunpack.c.l.b16 %v330
    %v1297 = vunpack.c.l.b16 %v331
    %v1298 = vunpack.c.l.b16 %v332
    %v1299 = vunpack.c.l.b16 %v333
    %v1300 = vunpack.c.l.b16 %v334
    %v1301 = vunpack.c.l.b16 %v335
    %v1302 = vunpack.c.l.b16 %v336
    %v1303 = vunpack.c.l.b16 %v337
    %v1304 = vunpack.c.l.b16 %v338
    %v1305 = vunpack.c.l.b16 %v339
    %v1306 = vunpack.c.l.b16 %v340
    %v1307 = vunpack.c.l.b16 %v341
    %v1308 = vunpack.c.l.b16 %v342
    %v1309 = vunpack.c.l.b16 %v343
    %v1310 = vunpack.c.l.b16 %v344
    %v1311 = vunpack.c.l.b16 %v345
    %v1312 = vunpack.c.l.b16 %v346
    %v1313 = vunpack.c.l.b16 %v347
    %v1314 = vunpack.c.l.b16 %v348
    %v1315 = vunpack.c.l.b16 %v349
    %v1316 = vunpack.c.l.b16 %v350
    %v1317 = vunpack.c.l.b16 %v351
    %v1318 = vunpack.c.l.b16 %v352
    %v1319 = vunpack.c.l.b16 %v353
    %v1320 = vunpack.c.l.b16 %v354
    %v1321 = vunpack.c.l.b16 %v355
    %v1322 = vunpack.c.l.b16 %v356
    %v1323 = vunpack.c.l.b16 %v357
    %v1324 = vunpack.c.l.b16 %v358
    %v1325 = vunpack.c.l.b16 %v359
    %v1326 = vunpack.c.l.b16 %v360
    %v1327 = vunpack.c.l.b16 %v361
    %v1328 = vunpack.c.l.b16 %v362
    %v1329 = vunpack.c.l.b16 %v363
    %v1330 = vunpack.c.l.b16 %v364
    %v1331 = vunpack.c.l.b16 %v365
    %v1332 = vunpack.c.l.b16 %v366
    %v1333 = vunpack.c.l.b16 %v367
    %v1334 = vunpack.c.l.b16 %v368
    %v1335 = vunpack.c.l.b16 %v369
    %v1336 = vunpack.c.l.b16 %v370
    %v1337 = vunpack.c.l.b16 %v371
    %v1338 = vunpack.c.l.b16 %v372
    %v1339 = vunpack.c.l.b16 %v373
    %v1340 = vunpack.c.l.b16 %v374
    %v1341 = vunpack.c.l.b16 %v375
    %v1342 = vunpack.c.l.b16 %v376
    %v1343 = vunpack.c.l.b16 %v377
    %v1344 = vunpack.c.l.b16 %v378
    %v1345 = vunpack.c.l.b16 %v379
    %v1346 = vunpack.c.l.b16 %v380
    %v1347 = vunpack.c.l.b16 %v381
    %v1348 = vunpack.c.l.b16 %v382
    %v1349 = vunpack.c.l.b16 %v383
    %v1350 = vunpack.c.l.b16 %v384
    %v1351 = vunpack.c.l.b16 %v385
    %v1352 = vunpack.c.l.b16 %v386
    %v1353 = vunpack.c.l.b16 %v387
    %v1354 = vunpack.c.l.b16 %v388
    %v1355 = vunpack.c.l.b16 %v389
    %v1356 = vunpack.c.l.b16 %v390
    %v1357 = vunpack.c.l.b16 %v391
    %v1358 = vunpack.c.l.b16 %v392
    %v1359 = vunpack.c.l.b16 %v393
    %v1360 = vunpack.c.l.b16 %v394
    %v1361 = vunpack.c.l.b16 %v395
    %v1362 = vunpack.c.l.b16 %v396
    %v1363 = vunpack.c.l.b16 %v397
    %v1364 = vunpack.c.l.b16 %v398
    %v1365 = vunpack.c.l.b16 %v399
    %v1366 = vunpack.c.l.b16 %v400
    %v1367 = vunpack.c.l.b16 %v401
    %v1368 = vunpack.c.l.b16 %v402
    %v1369 = vunpack.c.l.b16 %v403
    %v1370 = vunpack.c.l.b16 %v404
    %v1371 = vunpack.c.l.b16 %v405
    %v1372 = vunpack.c.l.b16 %v406
    %v1373 = vunpack.c.l.b16 %v407
    %v1374 = vunpack.c.l.b16 %v408
    %v1375 = vunpack.c.l.b16 %v409
    %v1376 = vunpack.c.l.b16 %v410
    %v1377 = vunpack.c.l.b16 %v411
    %v1378 = vunpack.c.l.b16 %v412
    %v1379 = vunpack.c.l.b16 %v413
    %v1380 = vunpack.c.l.b16 %v414
    %v1381 = vunpack.c.l.b16 %v415
    %v1382 = vunpack.c.l.b16 %v416
    %v1383 = vunpack.c.l.b16 %v417
    %v1384 = vunpack.c.l.b16 %v418
    %v1385 = vunpack.c.l.b16 %v419
    %v1386 = vunpack.c.l.b16 %v420
    %v1387 = vunpack.c.l.b16 %v421
    %v1388 = vunpack.c.l.b16 %v422
    %v1389 = vunpack.c.l.b16 %v423
    %v1390 = vunpack.c.l.b16 %v424
    %v1391 = vunpack.c.l.b16 %v425
    %v1392 = vunpack.c.l.b16 %v426
    %v1393 = vunpack.c.l.b16 %v427
    %v1394 = vunpack.c.l.b16 %v428
    %v1395 = vunpack.c.l.b16 %v429
    %v1396 = vunpack.c.l.b16 %v430
    %v1397 = vunpack.c.l.b16 %v431
    %v1398 = vunpack.c.l.b16 %v432
    %v1399 = vunpack.c.l.b16 %v433
    %v1400 = vunpack.c.l.b16 %v434
    %v1401 = vunpack.c.l.b16 %v435
    %v1402 = vunpack.c.l.b16 %v436
    %v1403 = vunpack.c.l.b16 %v437
    %v1404 = vunpack.c.l.b16 %v438
    %v1405 = vunpack.c.l.b16 %v439
    %v1406 = vunpack.c.l.b16 %v440
    %v1407 = vunpack.c.l.b16 %v441
    %v1408 = vunpack.c.l.b16 %v442
    %v1409 = vunpack.c.l.b16 %v443
    %v1410 = vunpack.c.l.b16 %v444
    %v1411 = vunpack.c.l.b16 %v445
    %v1412 = vunpack.c.l.b16 %v446
    %v1413 = vunpack.c.l.b16 %v447
    %v1414 = vunpack.c.l.b16 %v448
    %v1415 = vunpack.c.l.b16 %v449
    %v1416 = vunpack.c.l.b16 %v450
    %v1417 = vunpack.c.l.b16 %v451
    %v1418 = vunpack.c.l.b16 %v452
    %v1419 = vunpack.c.l.b16 %v453
    %v1420 = vunpack.c.l.b16 %v454
    %v1421 = vunpack.c.l.b16 %v455
    %v1422 = vunpack.c.l.b16 %v456
    %v1423 = vunpack.c.l.b16 %v457
    %v1424 = vunpack.c.l.b16 %v458
    %v1425 = vunpack.c.l.b16 %v459
    %v1426 = vunpack.c.l.b16 %v460
    %v1427 = vunpack.c.l.b16 %v461
    %v1428 = vunpack.c.l.b16 %v462
    %v1429 = vunpack.c.l.b16 %v463
    %v1430 = vunpack.c.l.b16 %v464
    %v1431 = vunpack.c.l.b16 %v465
    %v1432 = vunpack.c.l.b16 %v466
    %v1433 = vunpack.c.l.b16 %v467
    %v1434 = vunpack.c.l.b16 %v468
    %v1435 = vunpack.c.l.b16 %v469
    %v1436 = vunpack.c.l.b16 %v470
    %v1437 = vunpack.c.l.b16 %v471
    %v1438 = vunpack.c.l.b16 %v472
    %v1439 = vunpack.c.l.b16 %v473
    %v1440 = vunpack.c.l.b16 %v474
    %v1441 = vunpack.c.l.b16 %v475
    %v1442 = vunpack.c.l.b16 %v476
    %v1443 = vunpack.c.l.b16 %v477
    %v1444 = vunpack.c.l.b16 %v478
    %v1445 = vunpack.c.l.b16 %v479
    %v1446 = vunpack.c.l.b16 %v480
    %v1447 = vunpack.c.l.b16 %v481
    %v1448 = vunpack.c.l.b16 %v482
    %v1449 = vunpack.c.l.b16 %v483
    %v1450 = vunpack.c.l.b16 %v484
    %v1451 = vunpack.c.l.b16 %v485
    %v1452 = vpack.c.b16 %v1037, %v1036
    %v1453 = vpack.c.b16 %v1039, %v1038
    %v1454 = vpack.c.b16 %v1041, %v1040
    %v1455 = vpack.c.b16 %v1043, %v1042
    %v1456 = vpack.c.b16 %v1045, %v1044
    %v1457 = vpack.c.b16 %v1047, %v1046
    %v1458 = vpack.c.b16 %v1049, %v1048
    %v1459 = vpack.c.b16 %v1051, %v1050
    %v1460 = vpack.c.b16 %v1053, %v1052
    %v1461 = vpack.c.b16 %v1055, %v1054
    %v1462 = vpack.c.b16 %v1057, %v1056
    %v1463 = vpack.c.b16 %v1059, %v1058
    %v1464 = vpack.c.b16 %v1061, %v1060
    %v1465 = vpack.c.b16 %v1063, %v1062
    %v1466 = vpack.c.b16 %v1065, %v1064
    %v1467 = vpack.c.b16 %v1067, %v1066
    %v1468 = vpack.c.b16 %v1069, %v1068
    %v1469 = vpack.c.b16 %v1071, %v1070
    %v1470 = vpack.c.b16 %v1073, %v1072
    %v1471 = vpack.c.b16 %v1075, %v1074
    %v1472 = vpack.c.b16 %v1077, %v1076
    %v1473 = vpack.c.b16 %v1079, %v1078
    %v1474 = vpack.c.b16 %v1081, %v1080
    %v1475 = vpack.c.b16 %v1083, %v1082
    %v1476 = vpack.c.b16 %v1085, %v1084
    %v1477 = vpack.c.b16 %v1087, %v1086
    %v1478 = vpack.c.b16 %v1089, %v1088
    %v1479 = vpack.c.b16 %v1091, %v1090
    %v1480 = vpack.c.b16 %v1093, %v1092
    %v1481 = vpack.c.b16 %v1095, %v1094
    %v1482 = vpack.c.b16 %v1097, %v1096
    %v1483 = vpack.c.b16 %v1099, %v1098
    %v1484 = vpack.c.b16 %v1101, %v1100
    %v1485 = vpack.c.b16 %v1103, %v1102
    %v1486 = vpack.c.b16 %v1105, %v1104
    %v1487 = vpack.c.b16 %v1107, %v1106
    %v1488 = vpack.c.b16 %v1109, %v1108
    %v1489 = vpack.c.b16 %v1111, %v1110
    %v1490 = vpack.c.b16 %v1113, %v1112
    %v1491 = vpack.c.b16 %v1115, %v1114
    %v1492 = vpack.c.b16 %v1117, %v1116
    %v1493 = vpack.c.b16 %v1119, %v1118
    %v1494 = vpack.c.b16 %v1121, %v1120
    %v1495 = vpack.c.b16 %v1123, %v1122
    %v1496 = vpack.c.b16 %v1125, %v1124
    %v1497 = vpack.c.b16 %v1127, %v1126
    %v1498 = vpack.c.b16 %v1129, %v1128
    %v1499 = vpack.c.b16 %v1131, %v1130
    %v1500 = vpack.c.b16 %v1133, %v1132
    %v1501 = vpack.c.b16 %v1135, %v1134
    %v1502 = vpack.c.b16 %v1137, %v1136
    %v1503 = vpack.c.b16 %v1139, %v1138
    %v1504 = vpack.c.b16 %v1141, %v1140
    %v1505 = vpack.c.b16 %v1143, %v1142
    %v1506 = vpack.c.b16 %v1145, %v1144
    %v1507 = vpack.c.b16 %v1147, %v1146
    %v1508 = vpack.c.b16 %v1149, %v1148
    %v1509 = vpack.c.b16 %v1151, %v1150
    %v1510 = vpack.c.b16 %v1153, %v1152
    %v1511 = vpack.c.b16 %v1155, %v1154
    %v1512 = vpack.c.b16 %v1157, %v1156
    %v1513 = vpack.c.b16 %v1159, %v1158
    %v1514 = vpack.c.b16 %v1161, %v1160
    %v1515 = vpack.c.b16 %v1163, %v1162
    %v1516 = vpack.c.b16 %v1165, %v1164
    %v1517 = vpack.c.b16 %v1167, %v1166
    %v1518 = vpack.c.b16 %v1169, %v1168
    %v1519 = vpack.c.b16 %v1171, %v1170
    %v1520 = vpack.c.b16 %v1173, %v1172
    %v1521 = vpack.c.b16 %v1175, %v1174
    %v1522 = vpack.c.b16 %v1177, %v1176
    %v1523 = vpack.c.b16 %v1179, %v1178
    %v1524 = vpack.c.b16 %v1181, %v1180
    %v1525 = vpack.c.b16 %v1183, %v1182
    %v1526 = vpack.c.b16 %v1185, %v1184
    %v1527 = vpack.c.b16 %v1187, %v1186
    %v1528 = vpack.c.b16 %v1189, %v1188
    %v1529 = vpack.c.b16 %v1191, %v1190
    %v1530 = vpack.c.b16 %v1193, %v1192
    %v1531 = vpack.c.b16 %v1195, %v1194
    %v1532 = vpack.c.b16 %v1197, %v1196
    %v1533 = vpack.c.b16 %v1199, %v1198
    %v1534 = vpack.c.b16 %v1201, %v1200
    %v1535 = vpack.c.b16 %v1203, %v1202
    %v1536 = vpack.c.b16 %v1205, %v1204
    %v1537 = vpack.c.b16 %v1207, %v1206
    %v1538 = vpack.c.b16 %v1209, %v1208
    %v1539 = vpack.c.b16 %v1211, %v1210
    %v1540 = vpack.c.b16 %v1213, %v1212
    %v1541 = vpack.c.b16 %v1215, %v1214
    %v1542 = vpack.c.b16 %v1217, %v1216
    %v1543 = vpack.c.b16 %v1219, %v1218
    %v1544 = vpack.c.b16 %v1221, %v1220
    %v1545 = vpack.c.b16 %v1223, %v1222
    %v1546 = vpack.c.b16 %v1225, %v1224
    %v1547 = vpack.c.b16 %v1227, %v1226
    %v1548 = vpack.c.b16 %v1229, %v1228
    %v1549 = vpack.c.b16 %v1231, %v1230
    %v1550 = vpack.c.b16 %v1233, %v1232
    %v1551 = vpack.c.b16 %v1235, %v1234
    %v1552 = vpack.c.b16 %v1237, %v1236
    %v1553 = vpack.c.b16 %v1239, %v1238
    %v1554 = vpack.c.b16 %v1241, %v1240
    %v1555 = vpack.c.b16 %v1243, %v1242
    %v1556 = vpack.c.b16 %v1245, %v1244
    %v1557 = vpack.c.b16 %v1247, %v1246
    %v1558 = vpack.c.b16 %v1249, %v1248
    %v1559 = vpack.c.b16 %v1251, %v1250
    %v1560 = vpack.c.b16 %v1253, %v1252
    %v1561 = vpack.c.b16 %v1255, %v1254
    %v1562 = vpack.c.b16 %v1257, %v1256
    %v1563 = vpack.c.b16 %v1259, %v1258
    %v1564 = vpack.c.b16 %v1261, %v1260
    %v1565 = vpack.c.b16 %v1263, %v1262
    %v1566 = vpack.c.b16 %v1265, %v1264
    %v1567 = vpack.c.b16 %v1267, %v1266
    %v1568 = vpack.c.b16 %v1269, %v1268
    %v1569 = vpack.c.b16 %v1271, %v1270
    %v1570 = vpack.c.b16 %v1273, %v1272
    %v1571 = vpack.c.b16 %v1275, %v1274
    %v1572 = vpack.c.b16 %v1277, %v1276
    %v1573 = vpack.c.b16 %v1279, %v1278
    %v1574 = vpack.c.b16 %v1281, %v1280
    %v1575 = vpack.c.b16 %v1283, %v1282
    %v1576 = vpack.c.b16 %v1285, %v1284
    %v1577 = vpack.c.b16 %v1287, %v1286
    %v1578 = vpack.c.b16 %v1289, %v1288
    %v1579 = vpack.c.b16 %v1291, %v1290
    %v1580 = vpack.c.b16 %v1293, %v1292
    %v1581 = vpack.c.b16 %v1295, %v1294
    %v1582 = vpack.c.b16 %v1297, %v1296
    %v1583 = vpack.c.b16 %v1299, %v1298
    %v1584 = vpack.c.b16 %v1301, %v1300
    %v1585 = vpack.c.b16 %v1303, %v1302
    %v1586 = vpack.c.b16 %v1305, %v1304
    %v1587 = vpack.c.b16 %v1307, %v1306
    %v1588 = vpack.c.b16 %v1309, %v1308
    %v1589 = vpack.c.b16 %v1311, %v1310
    %v1590 = vpack.c.b16 %v1313, %v1312
    %v1591 = vpack.c.b16 %v1315, %v1314
    %v1592 = vpack.c.b16 %v1317, %v1316
    %v1593 = vpack.c.b16 %v1319, %v1318
    %v1594 = vpack.c.b16 %v1321, %v1320
    %v1595 = vpack.c.b16 %v1323, %v1322
    %v1596 = vpack.c.b16 %v1325, %v1324
    %v1597 = vpack.c.b16 %v1327, %v1326
    %v1598 = vpack.c.b16 %v1329, %v1328
    %v1599 = vpack.c.b16 %v1331, %v1330
    %v1600 = vpack.c.b16 %v1333, %v1332
    %v1601 = vpack.c.b16 %v1335, %v1334
    %v1602 = vpack.c.b16 %v1337, %v1336
    %v1603 = vpack.c.b16 %v1339, %v1338
    %v1604 = vpack.c.b16 %v1341, %v1340
    %v1605 = vpack.c.b16 %v1343, %v1342
    %v1606 = vpack.c.b16 %v1345, %v1344
    %v1607 = vpack.c.b16 %v1347, %v1346
    %v1608 = vpack.c.b16 %v1349, %v1348
    %v1609 = vpack.c.b16 %v1351, %v1350
    %v1610 = vpack.c.b16 %v1353, %v1352
    %v1611 = vpack.c.b16 %v1355, %v1354
    %v1612 = vpack.c.b16 %v1357, %v1356
    %v1613 = vpack.c.b16 %v1359, %v1358
    %v1614 = vpack.c.b16 %v1361, %v1360
    %v1615 = vpack.c.b16 %v1363, %v1362
    %v1616 = vpack.c.b16 %v1365, %v1364
    %v1617 = vpack.c.b16 %v1367, %v1366
    %v1618 = vpack.c.b16 %v1369, %v1368
    %v1619 = vpack.c.b16 %v1371, %v1370
    %v1620 = vpack.c.b16 %v1373, %v1372
    %v1621 = vpack.c.b16 %v1375, %v1374
    %v1622 = vpack.c.b16 %v1377, %v1376
    %v1623 = vpack.c.b16 %v1379, %v1378
    %v1624 = vpack.c.b16 %v1381, %v1380
    %v1625 = vpack.c.b16 %v1383, %v1382
    %v1626 = vpack.c.b16 %v1385, %v1384
    %v1627 = vpack.c.b16 %v1387, %v1386
    %v1628 = vpack.c.b16 %v1389, %v1388
    %v1629 = vpack.c.b16 %v1391, %v1390
    %v1630 = vpack.c.b16 %v1393, %v1392
    %v1631 = vpack.c.b16 %v1395, %v1394
    %v1632 = vpack.c.b16 %v1397, %v1396
    %v1633 = vpack.c.b16 %v1399, %v1398
    %v1634 = vpack.c.b16 %v1401, %v1400
    %v1635 = vpack.c.b16 %v1403, %v1402
    %v1636 = vpack.c.b16 %v1405, %v1404
    %v1637 = vpack.c.b16 %v1407, %v1406
    %v1638 = vpack.c.b16 %v1409, %v1408
    %v1639 = vpack.c.b16 %v1411, %v1410
    %v1640 = vpack.c.b16 %v1413, %v1412
    %v1641 = vpack.c.b16 %v1415, %v1414
    %v1642 = vpack.c.b16 %v1417, %v1416
    %v1643 = vpack.c.b16 %v1419, %v1418
    %v1644 = vpack.c.b16 %v1421, %v1420
    %v1645 = vpack.c.b16 %v1423, %v1422
    %v1646 = vpack.c.b16 %v1425, %v1424
    %v1647 = vpack.c.b16 %v1427, %v1426
    %v1648 = vpack.c.b16 %v1429, %v1428
    %v1649 = vpack.c.b16 %v1431, %v1430
    %v1650 = vpack.c.b16 %v1433, %v1432
    %v1651 = vpack.c.b16 %v1435, %v1434
    %v1652 = vpack.c.b16 %v1437, %v1436
    %v1653 = vpack.c.b16 %v1439, %v1438
    %v1654 = vpack.c.b16 %v1441, %v1440
    %v1655 = vpack.c.b16 %v1443, %v1442
    %v1656 = vpack.c.b16 %v1445, %v1444
    %v1657 = vpack.c.b16 %v1447, %v1446
    %v1658 = vpack.c.b16 %v1449, %v1448
    %v1659 = vpack.c.b16 %v1451, %v1450
    %1868 = vmatpush.bf16.msra.mxu0 %v1459
    %1869 = vmatpush.bf16.msra.mxu0 %v1458
    %1870 = vmatpush.bf16.msra.mxu0 %v1457
    %1871 = vmatpush.bf16.msra.mxu0 %v1456
    %1872 = vmatpush.bf16.msra.mxu0 %v1455
    %1873 = vmatpush.bf16.msra.mxu0 %v1454
    %1874 = vmatpush.bf16.msra.mxu0 %v1453
    %1875 = vmatpush.bf16.msra.mxu0 %v1452
    %1876 = vmatmul.bf16.gmra.mxu0 %v568
    %v1877 = vpop.f32.mrf.mxu0
    %v1878 = vadd.f32 %v488, %v1877
    %v1879 = vpop.f32.mrf.mxu0
    %v1880 = vadd.f32 %v488, %v1879
    %1881 = vdwg.mxu0
    %1882 = vmatpush.bf16.msra.mxu0 %v1467
    %1883 = vmatpush.bf16.msra.mxu0 %v1466
    %1884 = vmatpush.bf16.msra.mxu0 %v1465
    %1885 = vmatpush.bf16.msra.mxu0 %v1464
    %1886 = vmatpush.bf16.msra.mxu0 %v1463
    %1887 = vmatpush.bf16.msra.mxu0 %v1462
    %1888 = vmatpush.bf16.msra.mxu0 %v1461
    %1889 = vmatpush.bf16.msra.mxu0 %v1460
    %1890 = vmatmul.bf16.gmra.mxu0 %v569
    %v1891 = vpop.f32.mrf.mxu0
    %v1892 = vadd.f32 %v1878, %v1891
    %v1893 = vpop.f32.mrf.mxu0
    %v1894 = vadd.f32 %v1880, %v1893
    %1895 = vdwg.mxu0
    %1896 = vmatpush.bf16.msra.mxu0 %v1475
    %1897 = vmatpush.bf16.msra.mxu0 %v1474
    %1898 = vmatpush.bf16.msra.mxu0 %v1473
    %1899 = vmatpush.bf16.msra.mxu0 %v1472
    %1900 = vmatpush.bf16.msra.mxu0 %v1471
    %1901 = vmatpush.bf16.msra.mxu0 %v1470
    %1902 = vmatpush.bf16.msra.mxu0 %v1469
    %1903 = vmatpush.bf16.msra.mxu0 %v1468
    %1904 = vmatmul.bf16.gmra.mxu0 %v570
    %v1905 = vpop.f32.mrf.mxu0
    %v1906 = vadd.f32 %v1892, %v1905
    %v1907 = vpop.f32.mrf.mxu0
    %v1908 = vadd.f32 %v1894, %v1907
    %1909 = vdwg.mxu0
    %1910 = vmatpush.bf16.msra.mxu0 %v1483
    %1911 = vmatpush.bf16.msra.mxu0 %v1482
    %1912 = vmatpush.bf16.msra.mxu0 %v1481
    %1913 = vmatpush.bf16.msra.mxu0 %v1480
    %1914 = vmatpush.bf16.msra.mxu0 %v1479
    %1915 = vmatpush.bf16.msra.mxu0 %v1478
    %1916 = vmatpush.bf16.msra.mxu0 %v1477
    %1917 = vmatpush.bf16.msra.mxu0 %v1476
    %1918 = vmatmul.bf16.gmra.mxu0 %v571
    %v1919 = vpop.f32.mrf.mxu0
    %v1920 = vadd.f32 %v1906, %v1919
    %v1921 = vpop.f32.mrf.mxu0
    %v1922 = vadd.f32 %v1908, %v1921
    %1923 = vdwg.mxu0
    %1924 = vmatpush.bf16.msra.mxu0 %v1491
    %1925 = vmatpush.bf16.msra.mxu0 %v1490
    %1926 = vmatpush.bf16.msra.mxu0 %v1489
    %1927 = vmatpush.bf16.msra.mxu0 %v1488
    %1928 = vmatpush.bf16.msra.mxu0 %v1487
    %1929 = vmatpush.bf16.msra.mxu0 %v1486
    %1930 = vmatpush.bf16.msra.mxu0 %v1485
    %1931 = vmatpush.bf16.msra.mxu0 %v1484
    %1932 = vmatmul.bf16.gmra.mxu0 %v572
    %v1933 = vpop.f32.mrf.mxu0
    %v1934 = vadd.f32 %v1920, %v1933
    %v1935 = vpop.f32.mrf.mxu0
    %v1936 = vadd.f32 %v1922, %v1935
    %1937 = vdwg.mxu0
    %1938 = vmatpush.bf16.msra.mxu0 %v1499
    %1939 = vmatpush.bf16.msra.mxu0 %v1498
    %1940 = vmatpush.bf16.msra.mxu0 %v1497
    %1941 = vmatpush.bf16.msra.mxu0 %v1496
    %1942 = vmatpush.bf16.msra.mxu0 %v1495
    %1943 = vmatpush.bf16.msra.mxu0 %v1494
    %1944 = vmatpush.bf16.msra.mxu0 %v1493
    %1945 = vmatpush.bf16.msra.mxu0 %v1492
    %1946 = vmatmul.bf16.gmra.mxu0 %v573
    %v1947 = vpop.f32.mrf.mxu0
    %v1948 = vadd.f32 %v1934, %v1947
    %v1949 = vpop.f32.mrf.mxu0
    %v1950 = vadd.f32 %v1936, %v1949
    %1951 = vdwg.mxu0
    %1952 = vmatpush.bf16.msra.mxu0 %v1507
    %1953 = vmatpush.bf16.msra.mxu0 %v1506
    %1954 = vmatpush.bf16.msra.mxu0 %v1505
    %1955 = vmatpush.bf16.msra.mxu0 %v1504
    %1956 = vmatpush.bf16.msra.mxu0 %v1503
    %1957 = vmatpush.bf16.msra.mxu0 %v1502
    %1958 = vmatpush.bf16.msra.mxu0 %v1501
    %1959 = vmatpush.bf16.msra.mxu0 %v1500
    %1960 = vmatmul.bf16.gmra.mxu0 %v574
    %v1961 = vpop.f32.mrf.mxu0
    %v1962 = vadd.f32 %v1948, %v1961
    %v1963 = vpop.f32.mrf.mxu0
    %v1964 = vadd.f32 %v1950, %v1963
    %1965 = vdwg.mxu0
    %1966 = vmatpush.bf16.msra.mxu0 %v1515
    %1967 = vmatpush.bf16.msra.mxu0 %v1514
    %1968 = vmatpush.bf16.msra.mxu0 %v1513
    %1969 = vmatpush.bf16.msra.mxu0 %v1512
    %1970 = vmatpush.bf16.msra.mxu0 %v1511
    %1971 = vmatpush.bf16.msra.mxu0 %v1510
    %1972 = vmatpush.bf16.msra.mxu0 %v1509
    %1973 = vmatpush.bf16.msra.mxu0 %v1508
    %1974 = vmatmul.bf16.gmra.mxu0 %v575
    %v1975 = vpop.f32.mrf.mxu0
    %v1976 = vadd.f32 %v1962, %v1975
    %v1977 = vpop.f32.mrf.mxu0
    %v1978 = vadd.f32 %v1964, %v1977
    %1979 = vdwg.mxu0
    %1980 = vmatpush.bf16.msra.mxu0 %v1523
    %1981 = vmatpush.bf16.msra.mxu0 %v1522
    %1982 = vmatpush.bf16.msra.mxu0 %v1521
    %1983 = vmatpush.bf16.msra.mxu0 %v1520
    %1984 = vmatpush.bf16.msra.mxu0 %v1519
    %1985 = vmatpush.bf16.msra.mxu0 %v1518
    %1986 = vmatpush.bf16.msra.mxu0 %v1517
    %1987 = vmatpush.bf16.msra.mxu0 %v1516
    %1988 = vmatmul.bf16.gmra.mxu0 %v576
    %v1989 = vpop.f32.mrf.mxu0
    %v1990 = vadd.f32 %v1976, %v1989
    %v1991 = vpop.f32.mrf.mxu0
    %v1992 = vadd.f32 %v1978, %v1991
    %1993 = vdwg.mxu0
    %1994 = vmatpush.bf16.msra.mxu0 %v1531
    %1995 = vmatpush.bf16.msra.mxu0 %v1530
    %1996 = vmatpush.bf16.msra.mxu0 %v1529
    %1997 = vmatpush.bf16.msra.mxu0 %v1528
    %1998 = vmatpush.bf16.msra.mxu0 %v1527
    %1999 = vmatpush.bf16.msra.mxu0 %v1526
    %2000 = vmatpush.bf16.msra.mxu0 %v1525
    %2001 = vmatpush.bf16.msra.mxu0 %v1524
    %2002 = vmatmul.bf16.gmra.mxu0 %v577
    %v2003 = vpop.f32.mrf.mxu0
    %v2004 = vadd.f32 %v1990, %v2003
    %v2005 = vpop.f32.mrf.mxu0
    %v2006 = vadd.f32 %v1992, %v2005
    %2007 = vdwg.mxu0
    %2008 = vmatpush.bf16.msra.mxu0 %v1539
    %2009 = vmatpush.bf16.msra.mxu0 %v1538
    %2010 = vmatpush.bf16.msra.mxu0 %v1537
    %2011 = vmatpush.bf16.msra.mxu0 %v1536
    %2012 = vmatpush.bf16.msra.mxu0 %v1535
    %2013 = vmatpush.bf16.msra.mxu0 %v1534
    %2014 = vmatpush.bf16.msra.mxu0 %v1533
    %2015 = vmatpush.bf16.msra.mxu0 %v1532
    %2016 = vmatmul.bf16.gmra.mxu0 %v578
    %v2017 = vpop.f32.mrf.mxu0
    %v2018 = vadd.f32 %v2004, %v2017
    %v2019 = vpop.f32.mrf.mxu0
    %v2020 = vadd.f32 %v2006, %v2019
    %2021 = vdwg.mxu0
    %2022 = vmatpush.bf16.msra.mxu0 %v1547
    %2023 = vmatpush.bf16.msra.mxu0 %v1546
    %2024 = vmatpush.bf16.msra.mxu0 %v1545
    %2025 = vmatpush.bf16.msra.mxu0 %v1544
    %2026 = vmatpush.bf16.msra.mxu0 %v1543
    %2027 = vmatpush.bf16.msra.mxu0 %v1542
    %2028 = vmatpush.bf16.msra.mxu0 %v1541
    %2029 = vmatpush.bf16.msra.mxu0 %v1540
    %2030 = vmatmul.bf16.gmra.mxu0 %v579
    %v2031 = vpop.f32.mrf.mxu0
    %v2032 = vadd.f32 %v2018, %v2031
    %v2033 = vpop.f32.mrf.mxu0
    %v2034 = vadd.f32 %v2020, %v2033
    %2035 = vdwg.mxu0
    %2036 = vmatpush.bf16.msra.mxu0 %v1555
    %2037 = vmatpush.bf16.msra.mxu0 %v1554
    %2038 = vmatpush.bf16.msra.mxu0 %v1553
    %2039 = vmatpush.bf16.msra.mxu0 %v1552
    %2040 = vmatpush.bf16.msra.mxu0 %v1551
    %2041 = vmatpush.bf16.msra.mxu0 %v1550
    %2042 = vmatpush.bf16.msra.mxu0 %v1549
    %2043 = vmatpush.bf16.msra.mxu0 %v1548
    %2044 = vmatmul.bf16.gmra.mxu0 %v580
    %v2045 = vpop.f32.mrf.mxu0
    %v2046 = vadd.f32 %v2032, %v2045
    %v2047 = vpop.f32.mrf.mxu0
    %v2048 = vadd.f32 %v2034, %v2047
    %2049 = vdwg.mxu0
    %2050 = vmatpush.bf16.msra.mxu0 %v1563
    %2051 = vmatpush.bf16.msra.mxu0 %v1562
    %2052 = vmatpush.bf16.msra.mxu0 %v1561
    %2053 = vmatpush.bf16.msra.mxu0 %v1560
    %2054 = vmatpush.bf16.msra.mxu0 %v1559
    %2055 = vmatpush.bf16.msra.mxu0 %v1558
    %2056 = vmatpush.bf16.msra.mxu0 %v1557
    %2057 = vmatpush.bf16.msra.mxu0 %v1556
    %2058 = vmatmul.bf16.gmra.mxu0 %v581
    %v2059 = vpop.f32.mrf.mxu0
    %v2060 = vadd.f32 %v2046, %v2059
    %v2061 = vpop.f32.mrf.mxu0
    %v2062 = vadd.f32 %v2048, %v2061
    %2063 = vdwg.mxu0
    %2064 = vmatpush.bf16.msra.mxu0 %v1571
    %2065 = vmatpush.bf16.msra.mxu0 %v1570
    %2066 = vmatpush.bf16.msra.mxu0 %v1569
    %2067 = vmatpush.bf16.msra.mxu0 %v1568
    %2068 = vmatpush.bf16.msra.mxu0 %v1567
    %2069 = vmatpush.bf16.msra.mxu0 %v1566
    %2070 = vmatpush.bf16.msra.mxu0 %v1565
    %2071 = vmatpush.bf16.msra.mxu0 %v1564
    %2072 = vmatmul.bf16.gmra.mxu0 %v582
    %v2073 = vpop.f32.mrf.mxu0
    %v2074 = vadd.f32 %v2060, %v2073
    %v2075 = vpop.f32.mrf.mxu0
    %v2076 = vadd.f32 %v2062, %v2075
    %2077 = vdwg.mxu0
    %2078 = vmatpush.bf16.msra.mxu0 %v1579
    %2079 = vmatpush.bf16.msra.mxu0 %v1578
    %2080 = vmatpush.bf16.msra.mxu0 %v1577
    %2081 = vmatpush.bf16.msra.mxu0 %v1576
    %2082 = vmatpush.bf16.msra.mxu0 %v1575
    %2083 = vmatpush.bf16.msra.mxu0 %v1574
    %2084 = vmatpush.bf16.msra.mxu0 %v1573
    %2085 = vmatpush.bf16.msra.mxu0 %v1572
    %2086 = vmatmul.bf16.gmra.mxu0 %v583
    %v2087 = vpop.f32.mrf.mxu0
    %v2088 = vadd.f32 %v2074, %v2087
    %v2089 = vpop.f32.mrf.mxu0
    %v2090 = vadd.f32 %v2076, %v2089
    %2091 = vdwg.mxu0
    %2092 = vmatpush.bf16.msra.mxu0 %v1587
    %2093 = vmatpush.bf16.msra.mxu0 %v1586
    %2094 = vmatpush.bf16.msra.mxu0 %v1585
    %2095 = vmatpush.bf16.msra.mxu0 %v1584
    %2096 = vmatpush.bf16.msra.mxu0 %v1583
    %2097 = vmatpush.bf16.msra.mxu0 %v1582
    %2098 = vmatpush.bf16.msra.mxu0 %v1581
    %2099 = vmatpush.bf16.msra.mxu0 %v1580
    %2100 = vmatmul.bf16.gmra.mxu0 %v584
    %v2101 = vpop.f32.mrf.mxu0
    %v2102 = vadd.f32 %v2088, %v2101
    %v2103 = vpop.f32.mrf.mxu0
    %v2104 = vadd.f32 %v2090, %v2103
    %2105 = vdwg.mxu0
    %2106 = vmatpush.bf16.msra.mxu0 %v1595
    %2107 = vmatpush.bf16.msra.mxu0 %v1594
    %2108 = vmatpush.bf16.msra.mxu0 %v1593
    %2109 = vmatpush.bf16.msra.mxu0 %v1592
    %2110 = vmatpush.bf16.msra.mxu0 %v1591
    %2111 = vmatpush.bf16.msra.mxu0 %v1590
    %2112 = vmatpush.bf16.msra.mxu0 %v1589
    %2113 = vmatpush.bf16.msra.mxu0 %v1588
    %2114 = vmatmul.bf16.gmra.mxu0 %v585
    %v2115 = vpop.f32.mrf.mxu0
    %v2116 = vadd.f32 %v2102, %v2115
    %v2117 = vpop.f32.mrf.mxu0
    %v2118 = vadd.f32 %v2104, %v2117
    %2119 = vdwg.mxu0
    %2120 = vmatpush.bf16.msra.mxu0 %v1603
    %2121 = vmatpush.bf16.msra.mxu0 %v1602
    %2122 = vmatpush.bf16.msra.mxu0 %v1601
    %2123 = vmatpush.bf16.msra.mxu0 %v1600
    %2124 = vmatpush.bf16.msra.mxu0 %v1599
    %2125 = vmatpush.bf16.msra.mxu0 %v1598
    %2126 = vmatpush.bf16.msra.mxu0 %v1597
    %2127 = vmatpush.bf16.msra.mxu0 %v1596
    %2128 = vmatmul.bf16.gmra.mxu0 %v586
    %v2129 = vpop.f32.mrf.mxu0
    %v2130 = vadd.f32 %v2116, %v2129
    %v2131 = vpop.f32.mrf.mxu0
    %v2132 = vadd.f32 %v2118, %v2131
    %2133 = vdwg.mxu0
    %2134 = vmatpush.bf16.msra.mxu0 %v1611
    %2135 = vmatpush.bf16.msra.mxu0 %v1610
    %2136 = vmatpush.bf16.msra.mxu0 %v1609
    %2137 = vmatpush.bf16.msra.mxu0 %v1608
    %2138 = vmatpush.bf16.msra.mxu0 %v1607
    %2139 = vmatpush.bf16.msra.mxu0 %v1606
    %2140 = vmatpush.bf16.msra.mxu0 %v1605
    %2141 = vmatpush.bf16.msra.mxu0 %v1604
    %2142 = vmatmul.bf16.gmra.mxu0 %v587
    %v2143 = vpop.f32.mrf.mxu0
    %v2144 = vadd.f32 %v2130, %v2143
    %v2145 = vpop.f32.mrf.mxu0
    %v2146 = vadd.f32 %v2132, %v2145
    %2147 = vdwg.mxu0
    %2148 = vmatpush.bf16.msra.mxu0 %v1619
    %2149 = vmatpush.bf16.msra.mxu0 %v1618
    %2150 = vmatpush.bf16.msra.mxu0 %v1617
    %2151 = vmatpush.bf16.msra.mxu0 %v1616
    %2152 = vmatpush.bf16.msra.mxu0 %v1615
    %2153 = vmatpush.bf16.msra.mxu0 %v1614
    %2154 = vmatpush.bf16.msra.mxu0 %v1613
    %2155 = vmatpush.bf16.msra.mxu0 %v1612
    %2156 = vmatmul.bf16.gmra.mxu0 %v588
    %v2157 = vpop.f32.mrf.mxu0
    %v2158 = vadd.f32 %v2144, %v2157
    %v2159 = vpop.f32.mrf.mxu0
    %v2160 = vadd.f32 %v2146, %v2159
    %2161 = vdwg.mxu0
    %2162 = vmatpush.bf16.msra.mxu0 %v1627
    %2163 = vmatpush.bf16.msra.mxu0 %v1626
    %2164 = vmatpush.bf16.msra.mxu0 %v1625
    %2165 = vmatpush.bf16.msra.mxu0 %v1624
    %2166 = vmatpush.bf16.msra.mxu0 %v1623
    %2167 = vmatpush.bf16.msra.mxu0 %v1622
    %2168 = vmatpush.bf16.msra.mxu0 %v1621
    %2169 = vmatpush.bf16.msra.mxu0 %v1620
    %2170 = vmatmul.bf16.gmra.mxu0 %v589
    %v2171 = vpop.f32.mrf.mxu0
    %v2172 = vadd.f32 %v2158, %v2171
    %v2173 = vpop.f32.mrf.mxu0
    %v2174 = vadd.f32 %v2160, %v2173
    %2175 = vdwg.mxu0
    %2176 = vmatpush.bf16.msra.mxu0 %v1635
    %2177 = vmatpush.bf16.msra.mxu0 %v1634
    %2178 = vmatpush.bf16.msra.mxu0 %v1633
    %2179 = vmatpush.bf16.msra.mxu0 %v1632
    %2180 = vmatpush.bf16.msra.mxu0 %v1631
    %2181 = vmatpush.bf16.msra.mxu0 %v1630
    %2182 = vmatpush.bf16.msra.mxu0 %v1629
    %2183 = vmatpush.bf16.msra.mxu0 %v1628
    %2184 = vmatmul.bf16.gmra.mxu0 %v590
    %v2185 = vpop.f32.mrf.mxu0
    %v2186 = vadd.f32 %v2172, %v2185
    %v2187 = vpop.f32.mrf.mxu0
    %v2188 = vadd.f32 %v2174, %v2187
    %2189 = vdwg.mxu0
    %2190 = vmatpush.bf16.msra.mxu0 %v1643
    %2191 = vmatpush.bf16.msra.mxu0 %v1642
    %2192 = vmatpush.bf16.msra.mxu0 %v1641
    %2193 = vmatpush.bf16.msra.mxu0 %v1640
    %2194 = vmatpush.bf16.msra.mxu0 %v1639
    %2195 = vmatpush.bf16.msra.mxu0 %v1638
    %2196 = vmatpush.bf16.msra.mxu0 %v1637
    %2197 = vmatpush.bf16.msra.mxu0 %v1636
    %2198 = vmatmul.bf16.gmra.mxu0 %v591
    %v2199 = vpop.f32.mrf.mxu0
    %v2200 = vadd.f32 %v2186, %v2199
    %v2201 = vpop.f32.mrf.mxu0
    %v2202 = vadd.f32 %v2188, %v2201
    %2203 = vdwg.mxu0
    %2204 = vmatpush.bf16.msra.mxu0 %v1651
    %2205 = vmatpush.bf16.msra.mxu0 %v1650
    %2206 = vmatpush.bf16.msra.mxu0 %v1649
    %2207 = vmatpush.bf16.msra.mxu0 %v1648
    %2208 = vmatpush.bf16.msra.mxu0 %v1647
    %2209 = vmatpush.bf16.msra.mxu0 %v1646
    %2210 = vmatpush.bf16.msra.mxu0 %v1645
    %2211 = vmatpush.bf16.msra.mxu0 %v1644
    %2212 = vmatmul.bf16.gmra.mxu0 %v592
    %v2213 = vpop.f32.mrf.mxu0
    %v2214 = vadd.f32 %v2200, %v2213
    %v2215 = vpop.f32.mrf.mxu0
    %v2216 = vadd.f32 %v2202, %v2215
    %2217 = vdwg.mxu0
    %2218 = vmatpush.bf16.msra.mxu0 %v1659
    %2219 = vmatpush.bf16.msra.mxu0 %v1658
    %2220 = vmatpush.bf16.msra.mxu0 %v1657
    %2221 = vmatpush.bf16.msra.mxu0 %v1656
    %2222 = vmatpush.bf16.msra.mxu0 %v1655
    %2223 = vmatpush.bf16.msra.mxu0 %v1654
    %2224 = vmatpush.bf16.msra.mxu0 %v1653
    %2225 = vmatpush.bf16.msra.mxu0 %v1652
    %2226 = vmatmul.bf16.gmra.mxu0 %v593
    %v2227 = vpop.f32.mrf.mxu0
    %v2228 = vadd.f32 %v2214, %v2227
    %v2229 = vpop.f32.mrf.mxu0
    %v2230 = vadd.f32 %v2216, %v2229
    %2231 = vdwg.mxu0
    %v2232 = vtanh.pop %v2228
    %v2233 = vtanh.pop %v2230
    %2234 = vst [vmem:[%s3] sm:$0xff] %v2232
    %2235 = vst [vmem:[%s3 + $0x8] sm:$0xff] %v2233
    // Predicated region
    $region22: #{conv_tanh.1} parent=1 // pred_check
      _
    $region23: #{conv_tanh.1} parent=1 // pred_check_branch
      %2237 = sbr.rel (0) target = $region25
    $region24: #{conv_tanh.1} parent=1 // pred_region
      _
    $region25: #{conv_tanh.1} parent=1 // pred_fallthru
      _
    // Predicated region
    $region26: #{conv_tanh.1} parent=1 // pred_check
      _
    $region27: #{conv_tanh.1} parent=1 // pred_check_branch
      %2239 = sbr.rel (0) target = $region29
    $region28: #{conv_tanh.1} parent=1 // pred_region
      _
    $region29: #{conv_tanh.1} parent=1 // pred_fallthru
      _
    %2240 = vsyncpa [#allocation3], 1
    %2241 = vsyncpa [#allocation5], 1

</llo_original>
